<compile_context>
chip_gen: v6e
topology: v6e:2x2x1
jax: 0.10.0
libtpu: 0.0.40
codegen_flags: <defaults>
</compile_context>

<pallas_src>
import jax
import jax.numpy as jnp
import numpy as np
from jax.experimental import pallas as pl
from jax.experimental.pallas import tpu as pltpu


# ----------------------------------------------------------------------------
# Fused kernel: stacked LSTM -> attention softmax over time -> context -> FC.
# ----------------------------------------------------------------------------
def _make_fused_kernel(num_layers, seq_len, batch, hidden):
    T, B, H = seq_len, batch, hidden

    def _cast(v, dtype):
        return v if v.dtype == dtype else v.astype(dtype)

    def kernel(x_ref, *args):
        n = 3 * num_layers
        layer_refs = args[:n]
        (att_w_ref, att_b_ref, fcw_ref, fcb_ref,
         out_ref, seq_sc, flat_sc) = args[n:]

        # x_ref: (T*B, Din), time-major flattened rows (row index = t*B + b).
        cur = x_ref[...]
        h_list = []
        for l in range(num_layers):
            wih = layer_refs[3 * l][...]        # (Din, 4H), gates [i,f,o,g]
            whh = layer_refs[3 * l + 1][...]    # (H, 4H)
            bias = layer_refs[3 * l + 2][...]   # (1, 4H) = b_ih + b_hh (fp32)

            # Hoisted input projection: ONE matmul covering all timesteps.
            gx = jnp.dot(_cast(cur, wih.dtype), wih,
                         preferred_element_type=jnp.float32) + bias  # (T*B, 4H)

            h = jnp.zeros((B, H), jnp.float32)
            c = jnp.zeros((B, H), jnp.float32)
            last_layer = (l == num_layers - 1)
            h_list = []
            for t in range(T):                  # static unroll: T small & fixed
                gates = gx[t * B:(t + 1) * B, :] + jnp.dot(
                    _cast(h, whh.dtype), whh, preferred_element_type=jnp.float32)
                sfo = jax.nn.sigmoid(gates[:, :3 * H])   # [ i | f | o ]
                g_g = jnp.tanh(gates[:, 3 * H:])
                c = sfo[:, H:2 * H] * c + sfo[:, :H] * g_g
                h = sfo[:, 2 * H:3 * H] * jnp.tanh(c)
                if last_layer:
                    h_list.append(h)            # keep as values for attention
                else:
                    seq_sc[t * B:(t + 1) * B, :] = h
            if not last_layer:
                cur = seq_sc[...]               # (T*B, H) feeds next layer

        # Attention: softmax over time per batch row (PyTorch dim=1), computed
        # on (B, 1) per-step columns -- no transposes / relayouts needed.
        att_w = att_w_ref[...]                  # (1, H)
        att_b = att_b_ref[...]                  # (1, 1)
        s_list = [jnp.sum(h_t * att_w, axis=-1, keepdims=True) + att_b
                  for h_t in h_list]            # T x (B, 1)
        m = s_list[0]
        for s_t in s_list[1:]:
            m = jnp.maximum(m, s_t)
        e_list = [jnp.exp(s_t - m) for s_t in s_list]
        denom = e_list[0]
        for e_t in e_list[1:]:
            denom = denom + e_t

        # Context-weight each step and pack the lane-dense (B, T*H) FC operand
        # (matches torch's batch-first reshape(B, -1)).
        for t in range(T):
            flat_sc[:, t * H:(t + 1) * H] = (e_list[t] / denom) * h_list[t]

        # Final FC: a single matmul with K = T*H.
        flat = flat_sc[...]
        y = jnp.dot(_cast(flat, fcw_ref.dtype), fcw_ref[...],
                    preferred_element_type=jnp.float32) + fcb_ref[...]
        out_ref[...] = y

    return kernel


# ----------------------------------------------------------------------------
# Wrapper: one pallas_call for the whole forward pass.
# ----------------------------------------------------------------------------
def custom_lstm_forward(x, kparams, output_length, output_dim):
    """x: (B, T, input_dim), batch_first — matches the PyTorch module."""
    B, T, D = x.shape
    H = kparams["whh"][0].shape[0]
    L = len(kparams["wih"])
    O = output_dim * output_length

    # Time-major flatten of the raw input (row = t*B + b): one tiny XLA prep op
    # on the input only; all intermediates stay inside the fused kernel.
    x2d = jnp.transpose(x, (1, 0, 2)).reshape(T * B, D)

    vmem = pl.BlockSpec(memory_space=pltpu.MemorySpace.VMEM)
    inputs = [x2d]
    for l in range(L):
        inputs += [kparams["wih"][l], kparams["whh"][l], kparams["b"][l]]
    inputs += [kparams["att_w"], kparams["att_b"], kparams["fc_w"], kparams["fc_b"]]

    y = pl.pallas_call(
        _make_fused_kernel(L, T, B, H),
        out_shape=jax.ShapeDtypeStruct((B, O), jnp.float32),
        in_specs=[vmem] * len(inputs),
        out_specs=vmem,
        scratch_shapes=[
            pltpu.VMEM((T * B, H), jnp.float32),   # inter-layer sequence
            pltpu.VMEM((B, T * H), jnp.float32),   # flattened context vector
        ],
    )(*inputs)
    return y.reshape(B, output_length, output_dim)


# ----------------------------------------------------------------------------
# Parameter prep: PyTorch layout -> kernel layout (done once, outside kernel).
# ----------------------------------------------------------------------------
def _reorder_gate_rows(w):
    """PyTorch gate order [i, f, g, o] -> kernel order [i, f, o, g] (axis 0)."""
    H = w.shape[0] // 4
    return jnp.concatenate([w[:H], w[H:2 * H], w[3 * H:], w[2 * H:3 * H]], axis=0)


def prepare_kernel_params(params, compute_dtype=jnp.float32):
    """Pre-transpose + gate-reorder weights; optionally cast matmul operands
    (bf16 recommended on v6e/v7x at production shapes)."""
    kp = {"wih": [], "whh": [], "b": []}
    for wih, whh, bias in params["lstm"]:
        kp["wih"].append(_reorder_gate_rows(wih).T.astype(compute_dtype))   # (Din, 4H)
        kp["whh"].append(_reorder_gate_rows(whh).T.astype(compute_dtype))   # (H, 4H)
        kp["b"].append(_reorder_gate_rows(bias).reshape(1, -1).astype(jnp.float32))
    kp["att_w"] = params["att_w"].astype(jnp.float32)                       # (1, H)
    kp["att_b"] = params["att_b"].reshape(1, 1).astype(jnp.float32)
    kp["fc_w"] = params["fc_w"].T.astype(compute_dtype)                     # (T*H, O)
    kp["fc_b"] = params["fc_b"].reshape(1, -1).astype(jnp.float32)
    return kp


# ----------------------------------------------------------------------------
# Pure-JAX reference (PyTorch semantics / layout) for a sanity check.
# ----------------------------------------------------------------------------
def reference_forward(x, params, output_length, output_dim):
    B, T, _ = x.shape
    h_seq = x
    for (wih, whh, bias) in params["lstm"]:
        H = whh.shape[1]
        h = jnp.zeros((B, H), jnp.float32)
        c = jnp.zeros((B, H), jnp.float32)
        outs = []
        for t in range(T):
            gates = h_seq[:, t, :] @ wih.T + h @ whh.T + bias
            i_g = jax.nn.sigmoid(gates[:, 0:H])
            f_g = jax.nn.sigmoid(gates[:, H:2 * H])
            g_g = jnp.tanh(gates[:, 2 * H:3 * H])
            o_g = jax.nn.sigmoid(gates[:, 3 * H:4 * H])
            c = f_g * c + i_g * g_g
            h = o_g * jnp.tanh(c)
            outs.append(h)
        h_seq = jnp.stack(outs, axis=1)
    scores = h_seq @ params["att_w"].T + params["att_b"]   # (B, T, 1)
    w = jax.nn.softmax(scores, axis=1)
    ctx = w * h_seq
    flat = ctx.reshape(B, -1)
    y = flat @ params["fc_w"].T + params["fc_b"]
    return y.reshape(B, output_length, output_dim)


# ----------------------------------------------------------------------------
# Deterministic init (PyTorch-style uniform(-1/sqrt(fan), 1/sqrt(fan))).
# ----------------------------------------------------------------------------
def init_params(key, input_dim, hidden_dim, num_layers, input_length,
                output_dim, output_length):
    H = hidden_dim
    k = 1.0 / np.sqrt(H)
    params = {"lstm": []}
    for layer in range(num_layers):
        d_in = input_dim if layer == 0 else H
        key, k1, k2, k3, k4 = jax.random.split(key, 5)
        wih = jax.random.uniform(k1, (4 * H, d_in), jnp.float32, -k, k)
        whh = jax.random.uniform(k2, (4 * H, H), jnp.float32, -k, k)
        b_ih = jax.random.uniform(k3, (4 * H,), jnp.float32, -k, k)
        b_hh = jax.random.uniform(k4, (4 * H,), jnp.float32, -k, k)
        params["lstm"].append((wih, whh, b_ih + b_hh))
    key, k1, k2, k3, k4 = jax.random.split(key, 5)
    params["att_w"] = jax.random.uniform(k1, (1, H), jnp.float32, -k, k)
    params["att_b"] = jax.random.uniform(k2, (1,), jnp.float32, -k, k)
    fan_in = H * input_length
    kf = 1.0 / np.sqrt(fan_in)
    params["fc_w"] = jax.random.uniform(
        k3, (output_dim * output_length, fan_in), jnp.float32, -kf, kf)
    params["fc_b"] = jax.random.uniform(
        k4, (output_dim * output_length,), jnp.float32, -kf, kf)
    return params


if __name__ == "__main__":
    # Small shapes consistent with the module's forward.
    B, T, D = 2, 8, 4          # batch, input_length (seq), input_dim
    H, L = 32, 2               # hidden_dim, num_layers
    OD, OL = 2, 4              # output_dim, output_length

    key = jax.random.PRNGKey(0)
    key, kx = jax.random.split(key)
    x = jax.random.normal(kx, (B, T, D), jnp.float32)
    params = init_params(key, D, H, L, T, OD, OL)
    kparams = prepare_kernel_params(params, compute_dtype=jnp.float32)

    out = jax.block_until_ready(custom_lstm_forward(x, kparams, OL, OD))
    assert out.shape == (B, OL, OD), out.shape

    ref = jax.block_until_ready(reference_forward(x, params, OL, OD))
    np.testing.assert_allclose(np.asarray(out), np.asarray(ref),
                               rtol=1e-4, atol=1e-4)
    print("KERNEL_OK")
</pallas_src>

<mosaic_0001>
module attributes {stable_mosaic.version = 11 : i64} {
  func.func @kernel(%arg0: memref<16x4xf32, #tpu.memory_space<vmem>>, %arg1: memref<4x128xf32, #tpu.memory_space<vmem>>, %arg2: memref<32x128xf32, #tpu.memory_space<vmem>>, %arg3: memref<1x128xf32, #tpu.memory_space<vmem>>, %arg4: memref<32x128xf32, #tpu.memory_space<vmem>>, %arg5: memref<32x128xf32, #tpu.memory_space<vmem>>, %arg6: memref<1x128xf32, #tpu.memory_space<vmem>>, %arg7: memref<1x32xf32, #tpu.memory_space<vmem>>, %arg8: memref<1x1xf32, #tpu.memory_space<vmem>>, %arg9: memref<256x8xf32, #tpu.memory_space<vmem>>, %arg10: memref<1x8xf32, #tpu.memory_space<vmem>>, %arg11: memref<2x8xf32, #tpu.memory_space<vmem>>, %arg12: memref<16x32xf32, #tpu.memory_space<vmem>>, %arg13: memref<2x256xf32, #tpu.memory_space<vmem>>) attributes {dimension_semantics = [], scalar_prefetch = 0 : i64, scratch_operands = 2 : i64, tpu.core_type = #tpu.core_type<tc>} {
    %c0 = arith.constant 0 : index
    %c0_0 = arith.constant 0 : index
    %0 = vector.load %arg0[%c0, %c0_0] : memref<16x4xf32, #tpu.memory_space<vmem>>, vector<16x4xf32>
    %c0_1 = arith.constant 0 : index
    %c0_2 = arith.constant 0 : index
    %1 = vector.load %arg1[%c0_1, %c0_2] : memref<4x128xf32, #tpu.memory_space<vmem>>, vector<4x128xf32>
    %c0_3 = arith.constant 0 : index
    %c0_4 = arith.constant 0 : index
    %2 = vector.load %arg2[%c0_3, %c0_4] : memref<32x128xf32, #tpu.memory_space<vmem>>, vector<32x128xf32>
    %c0_5 = arith.constant 0 : index
    %c0_6 = arith.constant 0 : index
    %3 = vector.load %arg3[%c0_5, %c0_6] : memref<1x128xf32, #tpu.memory_space<vmem>>, vector<1x128xf32>
    %cst = arith.constant dense<0.000000e+00> : vector<16x128xf32>
    %4 = tpu.matmul %0, %1, %cst {dimension_numbers = #tpu.dot_dimension_numbers<[1], [0], [0], [1], [0, 0, 1, 1], [], []>} : vector<16x4xf32>, vector<4x128xf32>, vector<16x128xf32> -> vector<16x128xf32>
    %5 = vector.broadcast %3 : vector<1x128xf32> to vector<16x128xf32>
    %6 = arith.addf %4, %5 : vector<16x128xf32>
    %cst_7 = arith.constant 0.000000e+00 : f32
    %7 = vector.broadcast %cst_7 : f32 to vector<2x32xf32>
    %cst_8 = arith.constant 0.000000e+00 : f32
    %8 = vector.broadcast %cst_8 : f32 to vector<2x32xf32>
    %9 = vector.extract_strided_slice %6 {offsets = [0, 0], sizes = [2, 128], strides = [1, 1]} : vector<16x128xf32> to vector<2x128xf32>
    %cst_9 = arith.constant dense<0.000000e+00> : vector<2x128xf32>
    %10 = tpu.matmul %7, %2, %cst_9 {dimension_numbers = #tpu.dot_dimension_numbers<[1], [0], [0], [1], [0, 0, 1, 1], [], []>} : vector<2x32xf32>, vector<32x128xf32>, vector<2x128xf32> -> vector<2x128xf32>
    %11 = arith.addf %9, %10 : vector<2x128xf32>
    %12 = vector.extract_strided_slice %11 {offsets = [0, 0], sizes = [2, 96], strides = [1, 1]} : vector<2x128xf32> to vector<2x96xf32>
    %13 = arith.negf %12 : vector<2x96xf32>
    %14 = math.exp %13 : vector<2x96xf32>
    %cst_10 = arith.constant 1.000000e+00 : f32
    %15 = vector.broadcast %cst_10 : f32 to vector<2x96xf32>
    %16 = arith.addf %15, %14 : vector<2x96xf32>
    %17 = arith.divf %15, %16 : vector<2x96xf32>
    %18 = vector.extract_strided_slice %11 {offsets = [0, 96], sizes = [2, 32], strides = [1, 1]} : vector<2x128xf32> to vector<2x32xf32>
    %19 = math.tanh %18 : vector<2x32xf32>
    %20 = vector.extract_strided_slice %17 {offsets = [0, 32], sizes = [2, 32], strides = [1, 1]} : vector<2x96xf32> to vector<2x32xf32>
    %21 = arith.mulf %20, %8 : vector<2x32xf32>
    %22 = vector.extract_strided_slice %17 {offsets = [0, 0], sizes = [2, 32], strides = [1, 1]} : vector<2x96xf32> to vector<2x32xf32>
    %23 = arith.mulf %22, %19 : vector<2x32xf32>
    %24 = arith.addf %21, %23 : vector<2x32xf32>
    %25 = vector.extract_strided_slice %17 {offsets = [0, 64], sizes = [2, 32], strides = [1, 1]} : vector<2x96xf32> to vector<2x32xf32>
    %26 = math.tanh %24 : vector<2x32xf32>
    %27 = arith.mulf %25, %26 : vector<2x32xf32>
    %c0_11 = arith.constant 0 : index
    %c0_12 = arith.constant 0 : index
    %28 = vector.load %arg12[%c0_11, %c0_12] : memref<16x32xf32, #tpu.memory_space<vmem>>, vector<2x32xf32>
    tpu.vector_store %arg12[%c0_11, %c0_12], %27 {strides = array<i32>} : memref<16x32xf32, #tpu.memory_space<vmem>>, vector<2x32xf32>,
    %29 = vector.extract_strided_slice %6 {offsets = [2, 0], sizes = [2, 128], strides = [1, 1]} : vector<16x128xf32> to vector<2x128xf32>
    %cst_13 = arith.constant dense<0.000000e+00> : vector<2x128xf32>
    %30 = tpu.matmul %27, %2, %cst_13 {dimension_numbers = #tpu.dot_dimension_numbers<[1], [0], [0], [1], [0, 0, 1, 1], [], []>} : vector<2x32xf32>, vector<32x128xf32>, vector<2x128xf32> -> vector<2x128xf32>
    %31 = arith.addf %29, %30 : vector<2x128xf32>
    %32 = vector.extract_strided_slice %31 {offsets = [0, 0], sizes = [2, 96], strides = [1, 1]} : vector<2x128xf32> to vector<2x96xf32>
    %33 = arith.negf %32 : vector<2x96xf32>
    %34 = math.exp %33 : vector<2x96xf32>
    %cst_14 = arith.constant 1.000000e+00 : f32
    %35 = vector.broadcast %cst_14 : f32 to vector<2x96xf32>
    %36 = arith.addf %35, %34 : vector<2x96xf32>
    %37 = arith.divf %35, %36 : vector<2x96xf32>
    %38 = vector.extract_strided_slice %31 {offsets = [0, 96], sizes = [2, 32], strides = [1, 1]} : vector<2x128xf32> to vector<2x32xf32>
    %39 = math.tanh %38 : vector<2x32xf32>
    %40 = vector.extract_strided_slice %37 {offsets = [0, 32], sizes = [2, 32], strides = [1, 1]} : vector<2x96xf32> to vector<2x32xf32>
    %41 = arith.mulf %40, %24 : vector<2x32xf32>
    %42 = vector.extract_strided_slice %37 {offsets = [0, 0], sizes = [2, 32], strides = [1, 1]} : vector<2x96xf32> to vector<2x32xf32>
    %43 = arith.mulf %42, %39 : vector<2x32xf32>
    %44 = arith.addf %41, %43 : vector<2x32xf32>
    %45 = vector.extract_strided_slice %37 {offsets = [0, 64], sizes = [2, 32], strides = [1, 1]} : vector<2x96xf32> to vector<2x32xf32>
    %46 = math.tanh %44 : vector<2x32xf32>
    %47 = arith.mulf %45, %46 : vector<2x32xf32>
    %c2 = arith.constant 2 : index
    %c0_15 = arith.constant 0 : index
    %48 = vector.load %arg12[%c2, %c0_15] : memref<16x32xf32, #tpu.memory_space<vmem>>, vector<2x32xf32>
    tpu.vector_store %arg12[%c2, %c0_15], %47 {strides = array<i32>} : memref<16x32xf32, #tpu.memory_space<vmem>>, vector<2x32xf32>,
    %49 = vector.extract_strided_slice %6 {offsets = [4, 0], sizes = [2, 128], strides = [1, 1]} : vector<16x128xf32> to vector<2x128xf32>
    %cst_16 = arith.constant dense<0.000000e+00> : vector<2x128xf32>
    %50 = tpu.matmul %47, %2, %cst_16 {dimension_numbers = #tpu.dot_dimension_numbers<[1], [0], [0], [1], [0, 0, 1, 1], [], []>} : vector<2x32xf32>, vector<32x128xf32>, vector<2x128xf32> -> vector<2x128xf32>
    %51 = arith.addf %49, %50 : vector<2x128xf32>
    %52 = vector.extract_strided_slice %51 {offsets = [0, 0], sizes = [2, 96], strides = [1, 1]} : vector<2x128xf32> to vector<2x96xf32>
    %53 = arith.negf %52 : vector<2x96xf32>
    %54 = math.exp %53 : vector<2x96xf32>
    %cst_17 = arith.constant 1.000000e+00 : f32
    %55 = vector.broadcast %cst_17 : f32 to vector<2x96xf32>
    %56 = arith.addf %55, %54 : vector<2x96xf32>
    %57 = arith.divf %55, %56 : vector<2x96xf32>
    %58 = vector.extract_strided_slice %51 {offsets = [0, 96], sizes = [2, 32], strides = [1, 1]} : vector<2x128xf32> to vector<2x32xf32>
    %59 = math.tanh %58 : vector<2x32xf32>
    %60 = vector.extract_strided_slice %57 {offsets = [0, 32], sizes = [2, 32], strides = [1, 1]} : vector<2x96xf32> to vector<2x32xf32>
    %61 = arith.mulf %60, %44 : vector<2x32xf32>
    %62 = vector.extract_strided_slice %57 {offsets = [0, 0], sizes = [2, 32], strides = [1, 1]} : vector<2x96xf32> to vector<2x32xf32>
    %63 = arith.mulf %62, %59 : vector<2x32xf32>
    %64 = arith.addf %61, %63 : vector<2x32xf32>
    %65 = vector.extract_strided_slice %57 {offsets = [0, 64], sizes = [2, 32], strides = [1, 1]} : vector<2x96xf32> to vector<2x32xf32>
    %66 = math.tanh %64 : vector<2x32xf32>
    %67 = arith.mulf %65, %66 : vector<2x32xf32>
    %c4 = arith.constant 4 : index
    %c0_18 = arith.constant 0 : index
    %68 = vector.load %arg12[%c4, %c0_18] : memref<16x32xf32, #tpu.memory_space<vmem>>, vector<2x32xf32>
    tpu.vector_store %arg12[%c4, %c0_18], %67 {strides = array<i32>} : memref<16x32xf32, #tpu.memory_space<vmem>>, vector<2x32xf32>,
    %69 = vector.extract_strided_slice %6 {offsets = [6, 0], sizes = [2, 128], strides = [1, 1]} : vector<16x128xf32> to vector<2x128xf32>
    %cst_19 = arith.constant dense<0.000000e+00> : vector<2x128xf32>
    %70 = tpu.matmul %67, %2, %cst_19 {dimension_numbers = #tpu.dot_dimension_numbers<[1], [0], [0], [1], [0, 0, 1, 1], [], []>} : vector<2x32xf32>, vector<32x128xf32>, vector<2x128xf32> -> vector<2x128xf32>
    %71 = arith.addf %69, %70 : vector<2x128xf32>
    %72 = vector.extract_strided_slice %71 {offsets = [0, 0], sizes = [2, 96], strides = [1, 1]} : vector<2x128xf32> to vector<2x96xf32>
    %73 = arith.negf %72 : vector<2x96xf32>
    %74 = math.exp %73 : vector<2x96xf32>
    %cst_20 = arith.constant 1.000000e+00 : f32
    %75 = vector.broadcast %cst_20 : f32 to vector<2x96xf32>
    %76 = arith.addf %75, %74 : vector<2x96xf32>
    %77 = arith.divf %75, %76 : vector<2x96xf32>
    %78 = vector.extract_strided_slice %71 {offsets = [0, 96], sizes = [2, 32], strides = [1, 1]} : vector<2x128xf32> to vector<2x32xf32>
    %79 = math.tanh %78 : vector<2x32xf32>
    %80 = vector.extract_strided_slice %77 {offsets = [0, 32], sizes = [2, 32], strides = [1, 1]} : vector<2x96xf32> to vector<2x32xf32>
    %81 = arith.mulf %80, %64 : vector<2x32xf32>
    %82 = vector.extract_strided_slice %77 {offsets = [0, 0], sizes = [2, 32], strides = [1, 1]} : vector<2x96xf32> to vector<2x32xf32>
    %83 = arith.mulf %82, %79 : vector<2x32xf32>
    %84 = arith.addf %81, %83 : vector<2x32xf32>
    %85 = vector.extract_strided_slice %77 {offsets = [0, 64], sizes = [2, 32], strides = [1, 1]} : vector<2x96xf32> to vector<2x32xf32>
    %86 = math.tanh %84 : vector<2x32xf32>
    %87 = arith.mulf %85, %86 : vector<2x32xf32>
    %c6 = arith.constant 6 : index
    %c0_21 = arith.constant 0 : index
    %88 = vector.load %arg12[%c6, %c0_21] : memref<16x32xf32, #tpu.memory_space<vmem>>, vector<2x32xf32>
    tpu.vector_store %arg12[%c6, %c0_21], %87 {strides = array<i32>} : memref<16x32xf32, #tpu.memory_space<vmem>>, vector<2x32xf32>,
    %89 = vector.extract_strided_slice %6 {offsets = [8, 0], sizes = [2, 128], strides = [1, 1]} : vector<16x128xf32> to vector<2x128xf32>
    %cst_22 = arith.constant dense<0.000000e+00> : vector<2x128xf32>
    %90 = tpu.matmul %87, %2, %cst_22 {dimension_numbers = #tpu.dot_dimension_numbers<[1], [0], [0], [1], [0, 0, 1, 1], [], []>} : vector<2x32xf32>, vector<32x128xf32>, vector<2x128xf32> -> vector<2x128xf32>
    %91 = arith.addf %89, %90 : vector<2x128xf32>
    %92 = vector.extract_strided_slice %91 {offsets = [0, 0], sizes = [2, 96], strides = [1, 1]} : vector<2x128xf32> to vector<2x96xf32>
    %93 = arith.negf %92 : vector<2x96xf32>
    %94 = math.exp %93 : vector<2x96xf32>
    %cst_23 = arith.constant 1.000000e+00 : f32
    %95 = vector.broadcast %cst_23 : f32 to vector<2x96xf32>
    %96 = arith.addf %95, %94 : vector<2x96xf32>
    %97 = arith.divf %95, %96 : vector<2x96xf32>
    %98 = vector.extract_strided_slice %91 {offsets = [0, 96], sizes = [2, 32], strides = [1, 1]} : vector<2x128xf32> to vector<2x32xf32>
    %99 = math.tanh %98 : vector<2x32xf32>
    %100 = vector.extract_strided_slice %97 {offsets = [0, 32], sizes = [2, 32], strides = [1, 1]} : vector<2x96xf32> to vector<2x32xf32>
    %101 = arith.mulf %100, %84 : vector<2x32xf32>
    %102 = vector.extract_strided_slice %97 {offsets = [0, 0], sizes = [2, 32], strides = [1, 1]} : vector<2x96xf32> to vector<2x32xf32>
    %103 = arith.mulf %102, %99 : vector<2x32xf32>
    %104 = arith.addf %101, %103 : vector<2x32xf32>
    %105 = vector.extract_strided_slice %97 {offsets = [0, 64], sizes = [2, 32], strides = [1, 1]} : vector<2x96xf32> to vector<2x32xf32>
    %106 = math.tanh %104 : vector<2x32xf32>
    %107 = arith.mulf %105, %106 : vector<2x32xf32>
    %c8 = arith.constant 8 : index
    %c0_24 = arith.constant 0 : index
    %108 = vector.load %arg12[%c8, %c0_24] : memref<16x32xf32, #tpu.memory_space<vmem>>, vector<2x32xf32>
    tpu.vector_store %arg12[%c8, %c0_24], %107 {strides = array<i32>} : memref<16x32xf32, #tpu.memory_space<vmem>>, vector<2x32xf32>,
    %109 = vector.extract_strided_slice %6 {offsets = [10, 0], sizes = [2, 128], strides = [1, 1]} : vector<16x128xf32> to vector<2x128xf32>
    %cst_25 = arith.constant dense<0.000000e+00> : vector<2x128xf32>
    %110 = tpu.matmul %107, %2, %cst_25 {dimension_numbers = #tpu.dot_dimension_numbers<[1], [0], [0], [1], [0, 0, 1, 1], [], []>} : vector<2x32xf32>, vector<32x128xf32>, vector<2x128xf32> -> vector<2x128xf32>
    %111 = arith.addf %109, %110 : vector<2x128xf32>
    %112 = vector.extract_strided_slice %111 {offsets = [0, 0], sizes = [2, 96], strides = [1, 1]} : vector<2x128xf32> to vector<2x96xf32>
    %113 = arith.negf %112 : vector<2x96xf32>
    %114 = math.exp %113 : vector<2x96xf32>
    %cst_26 = arith.constant 1.000000e+00 : f32
    %115 = vector.broadcast %cst_26 : f32 to vector<2x96xf32>
    %116 = arith.addf %115, %114 : vector<2x96xf32>
    %117 = arith.divf %115, %116 : vector<2x96xf32>
    %118 = vector.extract_strided_slice %111 {offsets = [0, 96], sizes = [2, 32], strides = [1, 1]} : vector<2x128xf32> to vector<2x32xf32>
    %119 = math.tanh %118 : vector<2x32xf32>
    %120 = vector.extract_strided_slice %117 {offsets = [0, 32], sizes = [2, 32], strides = [1, 1]} : vector<2x96xf32> to vector<2x32xf32>
    %121 = arith.mulf %120, %104 : vector<2x32xf32>
    %122 = vector.extract_strided_slice %117 {offsets = [0, 0], sizes = [2, 32], strides = [1, 1]} : vector<2x96xf32> to vector<2x32xf32>
    %123 = arith.mulf %122, %119 : vector<2x32xf32>
    %124 = arith.addf %121, %123 : vector<2x32xf32>
    %125 = vector.extract_strided_slice %117 {offsets = [0, 64], sizes = [2, 32], strides = [1, 1]} : vector<2x96xf32> to vector<2x32xf32>
    %126 = math.tanh %124 : vector<2x32xf32>
    %127 = arith.mulf %125, %126 : vector<2x32xf32>
    %c10 = arith.constant 10 : index
    %c0_27 = arith.constant 0 : index
    %128 = vector.load %arg12[%c10, %c0_27] : memref<16x32xf32, #tpu.memory_space<vmem>>, vector<2x32xf32>
    tpu.vector_store %arg12[%c10, %c0_27], %127 {strides = array<i32>} : memref<16x32xf32, #tpu.memory_space<vmem>>, vector<2x32xf32>,
    %129 = vector.extract_strided_slice %6 {offsets = [12, 0], sizes = [2, 128], strides = [1, 1]} : vector<16x128xf32> to vector<2x128xf32>
    %cst_28 = arith.constant dense<0.000000e+00> : vector<2x128xf32>
    %130 = tpu.matmul %127, %2, %cst_28 {dimension_numbers = #tpu.dot_dimension_numbers<[1], [0], [0], [1], [0, 0, 1, 1], [], []>} : vector<2x32xf32>, vector<32x128xf32>, vector<2x128xf32> -> vector<2x128xf32>
    %131 = arith.addf %129, %130 : vector<2x128xf32>
    %132 = vector.extract_strided_slice %131 {offsets = [0, 0], sizes = [2, 96], strides = [1, 1]} : vector<2x128xf32> to vector<2x96xf32>
    %133 = arith.negf %132 : vector<2x96xf32>
    %134 = math.exp %133 : vector<2x96xf32>
    %cst_29 = arith.constant 1.000000e+00 : f32
    %135 = vector.broadcast %cst_29 : f32 to vector<2x96xf32>
    %136 = arith.addf %135, %134 : vector<2x96xf32>
    %137 = arith.divf %135, %136 : vector<2x96xf32>
    %138 = vector.extract_strided_slice %131 {offsets = [0, 96], sizes = [2, 32], strides = [1, 1]} : vector<2x128xf32> to vector<2x32xf32>
    %139 = math.tanh %138 : vector<2x32xf32>
    %140 = vector.extract_strided_slice %137 {offsets = [0, 32], sizes = [2, 32], strides = [1, 1]} : vector<2x96xf32> to vector<2x32xf32>
    %141 = arith.mulf %140, %124 : vector<2x32xf32>
    %142 = vector.extract_strided_slice %137 {offsets = [0, 0], sizes = [2, 32], strides = [1, 1]} : vector<2x96xf32> to vector<2x32xf32>
    %143 = arith.mulf %142, %139 : vector<2x32xf32>
    %144 = arith.addf %141, %143 : vector<2x32xf32>
    %145 = vector.extract_strided_slice %137 {offsets = [0, 64], sizes = [2, 32], strides = [1, 1]} : vector<2x96xf32> to vector<2x32xf32>
    %146 = math.tanh %144 : vector<2x32xf32>
    %147 = arith.mulf %145, %146 : vector<2x32xf32>
    %c12 = arith.constant 12 : index
    %c0_30 = arith.constant 0 : index
    %148 = vector.load %arg12[%c12, %c0_30] : memref<16x32xf32, #tpu.memory_space<vmem>>, vector<2x32xf32>
    tpu.vector_store %arg12[%c12, %c0_30], %147 {strides = array<i32>} : memref<16x32xf32, #tpu.memory_space<vmem>>, vector<2x32xf32>,
    %149 = vector.extract_strided_slice %6 {offsets = [14, 0], sizes = [2, 128], strides = [1, 1]} : vector<16x128xf32> to vector<2x128xf32>
    %cst_31 = arith.constant dense<0.000000e+00> : vector<2x128xf32>
    %150 = tpu.matmul %147, %2, %cst_31 {dimension_numbers = #tpu.dot_dimension_numbers<[1], [0], [0], [1], [0, 0, 1, 1], [], []>} : vector<2x32xf32>, vector<32x128xf32>, vector<2x128xf32> -> vector<2x128xf32>
    %151 = arith.addf %149, %150 : vector<2x128xf32>
    %152 = vector.extract_strided_slice %151 {offsets = [0, 0], sizes = [2, 96], strides = [1, 1]} : vector<2x128xf32> to vector<2x96xf32>
    %153 = arith.negf %152 : vector<2x96xf32>
    %154 = math.exp %153 : vector<2x96xf32>
    %cst_32 = arith.constant 1.000000e+00 : f32
    %155 = vector.broadcast %cst_32 : f32 to vector<2x96xf32>
    %156 = arith.addf %155, %154 : vector<2x96xf32>
    %157 = arith.divf %155, %156 : vector<2x96xf32>
    %158 = vector.extract_strided_slice %151 {offsets = [0, 96], sizes = [2, 32], strides = [1, 1]} : vector<2x128xf32> to vector<2x32xf32>
    %159 = math.tanh %158 : vector<2x32xf32>
    %160 = vector.extract_strided_slice %157 {offsets = [0, 32], sizes = [2, 32], strides = [1, 1]} : vector<2x96xf32> to vector<2x32xf32>
    %161 = arith.mulf %160, %144 : vector<2x32xf32>
    %162 = vector.extract_strided_slice %157 {offsets = [0, 0], sizes = [2, 32], strides = [1, 1]} : vector<2x96xf32> to vector<2x32xf32>
    %163 = arith.mulf %162, %159 : vector<2x32xf32>
    %164 = arith.addf %161, %163 : vector<2x32xf32>
    %165 = vector.extract_strided_slice %157 {offsets = [0, 64], sizes = [2, 32], strides = [1, 1]} : vector<2x96xf32> to vector<2x32xf32>
    %166 = math.tanh %164 : vector<2x32xf32>
    %167 = arith.mulf %165, %166 : vector<2x32xf32>
    %c14 = arith.constant 14 : index
    %c0_33 = arith.constant 0 : index
    %168 = vector.load %arg12[%c14, %c0_33] : memref<16x32xf32, #tpu.memory_space<vmem>>, vector<2x32xf32>
    tpu.vector_store %arg12[%c14, %c0_33], %167 {strides = array<i32>} : memref<16x32xf32, #tpu.memory_space<vmem>>, vector<2x32xf32>,
    %c0_34 = arith.constant 0 : index
    %c0_35 = arith.constant 0 : index
    %169 = vector.load %arg12[%c0_34, %c0_35] : memref<16x32xf32, #tpu.memory_space<vmem>>, vector<16x32xf32>
    %c0_36 = arith.constant 0 : index
    %c0_37 = arith.constant 0 : index
    %170 = vector.load %arg4[%c0_36, %c0_37] : memref<32x128xf32, #tpu.memory_space<vmem>>, vector<32x128xf32>
    %c0_38 = arith.constant 0 : index
    %c0_39 = arith.constant 0 : index
    %171 = vector.load %arg5[%c0_38, %c0_39] : memref<32x128xf32, #tpu.memory_space<vmem>>, vector<32x128xf32>
    %c0_40 = arith.constant 0 : index
    %c0_41 = arith.constant 0 : index
    %172 = vector.load %arg6[%c0_40, %c0_41] : memref<1x128xf32, #tpu.memory_space<vmem>>, vector<1x128xf32>
    %cst_42 = arith.constant dense<0.000000e+00> : vector<16x128xf32>
    %173 = tpu.matmul %169, %170, %cst_42 {dimension_numbers = #tpu.dot_dimension_numbers<[1], [0], [0], [1], [0, 0, 1, 1], [], []>} : vector<16x32xf32>, vector<32x128xf32>, vector<16x128xf32> -> vector<16x128xf32>
    %174 = vector.broadcast %172 : vector<1x128xf32> to vector<16x128xf32>
    %175 = arith.addf %173, %174 : vector<16x128xf32>
    %cst_43 = arith.constant 0.000000e+00 : f32
    %176 = vector.broadcast %cst_43 : f32 to vector<2x32xf32>
    %cst_44 = arith.constant 0.000000e+00 : f32
    %177 = vector.broadcast %cst_44 : f32 to vector<2x32xf32>
    %178 = vector.extract_strided_slice %175 {offsets = [0, 0], sizes = [2, 128], strides = [1, 1]} : vector<16x128xf32> to vector<2x128xf32>
    %cst_45 = arith.constant dense<0.000000e+00> : vector<2x128xf32>
    %179 = tpu.matmul %176, %171, %cst_45 {dimension_numbers = #tpu.dot_dimension_numbers<[1], [0], [0], [1], [0, 0, 1, 1], [], []>} : vector<2x32xf32>, vector<32x128xf32>, vector<2x128xf32> -> vector<2x128xf32>
    %180 = arith.addf %178, %179 : vector<2x128xf32>
    %181 = vector.extract_strided_slice %180 {offsets = [0, 0], sizes = [2, 96], strides = [1, 1]} : vector<2x128xf32> to vector<2x96xf32>
    %182 = arith.negf %181 : vector<2x96xf32>
    %183 = math.exp %182 : vector<2x96xf32>
    %cst_46 = arith.constant 1.000000e+00 : f32
    %184 = vector.broadcast %cst_46 : f32 to vector<2x96xf32>
    %185 = arith.addf %184, %183 : vector<2x96xf32>
    %186 = arith.divf %184, %185 : vector<2x96xf32>
    %187 = vector.extract_strided_slice %180 {offsets = [0, 96], sizes = [2, 32], strides = [1, 1]} : vector<2x128xf32> to vector<2x32xf32>
    %188 = math.tanh %187 : vector<2x32xf32>
    %189 = vector.extract_strided_slice %186 {offsets = [0, 32], sizes = [2, 32], strides = [1, 1]} : vector<2x96xf32> to vector<2x32xf32>
    %190 = arith.mulf %189, %177 : vector<2x32xf32>
    %191 = vector.extract_strided_slice %186 {offsets = [0, 0], sizes = [2, 32], strides = [1, 1]} : vector<2x96xf32> to vector<2x32xf32>
    %192 = arith.mulf %191, %188 : vector<2x32xf32>
    %193 = arith.addf %190, %192 : vector<2x32xf32>
    %194 = vector.extract_strided_slice %186 {offsets = [0, 64], sizes = [2, 32], strides = [1, 1]} : vector<2x96xf32> to vector<2x32xf32>
    %195 = math.tanh %193 : vector<2x32xf32>
    %196 = arith.mulf %194, %195 : vector<2x32xf32>
    %197 = vector.extract_strided_slice %175 {offsets = [2, 0], sizes = [2, 128], strides = [1, 1]} : vector<16x128xf32> to vector<2x128xf32>
    %cst_47 = arith.constant dense<0.000000e+00> : vector<2x128xf32>
    %198 = tpu.matmul %196, %171, %cst_47 {dimension_numbers = #tpu.dot_dimension_numbers<[1], [0], [0], [1], [0, 0, 1, 1], [], []>} : vector<2x32xf32>, vector<32x128xf32>, vector<2x128xf32> -> vector<2x128xf32>
    %199 = arith.addf %197, %198 : vector<2x128xf32>
    %200 = vector.extract_strided_slice %199 {offsets = [0, 0], sizes = [2, 96], strides = [1, 1]} : vector<2x128xf32> to vector<2x96xf32>
    %201 = arith.negf %200 : vector<2x96xf32>
    %202 = math.exp %201 : vector<2x96xf32>
    %cst_48 = arith.constant 1.000000e+00 : f32
    %203 = vector.broadcast %cst_48 : f32 to vector<2x96xf32>
    %204 = arith.addf %203, %202 : vector<2x96xf32>
    %205 = arith.divf %203, %204 : vector<2x96xf32>
    %206 = vector.extract_strided_slice %199 {offsets = [0, 96], sizes = [2, 32], strides = [1, 1]} : vector<2x128xf32> to vector<2x32xf32>
    %207 = math.tanh %206 : vector<2x32xf32>
    %208 = vector.extract_strided_slice %205 {offsets = [0, 32], sizes = [2, 32], strides = [1, 1]} : vector<2x96xf32> to vector<2x32xf32>
    %209 = arith.mulf %208, %193 : vector<2x32xf32>
    %210 = vector.extract_strided_slice %205 {offsets = [0, 0], sizes = [2, 32], strides = [1, 1]} : vector<2x96xf32> to vector<2x32xf32>
    %211 = arith.mulf %210, %207 : vector<2x32xf32>
    %212 = arith.addf %209, %211 : vector<2x32xf32>
    %213 = vector.extract_strided_slice %205 {offsets = [0, 64], sizes = [2, 32], strides = [1, 1]} : vector<2x96xf32> to vector<2x32xf32>
    %214 = math.tanh %212 : vector<2x32xf32>
    %215 = arith.mulf %213, %214 : vector<2x32xf32>
    %216 = vector.extract_strided_slice %175 {offsets = [4, 0], sizes = [2, 128], strides = [1, 1]} : vector<16x128xf32> to vector<2x128xf32>
    %cst_49 = arith.constant dense<0.000000e+00> : vector<2x128xf32>
    %217 = tpu.matmul %215, %171, %cst_49 {dimension_numbers = #tpu.dot_dimension_numbers<[1], [0], [0], [1], [0, 0, 1, 1], [], []>} : vector<2x32xf32>, vector<32x128xf32>, vector<2x128xf32> -> vector<2x128xf32>
    %218 = arith.addf %216, %217 : vector<2x128xf32>
    %219 = vector.extract_strided_slice %218 {offsets = [0, 0], sizes = [2, 96], strides = [1, 1]} : vector<2x128xf32> to vector<2x96xf32>
    %220 = arith.negf %219 : vector<2x96xf32>
    %221 = math.exp %220 : vector<2x96xf32>
    %cst_50 = arith.constant 1.000000e+00 : f32
    %222 = vector.broadcast %cst_50 : f32 to vector<2x96xf32>
    %223 = arith.addf %222, %221 : vector<2x96xf32>
    %224 = arith.divf %222, %223 : vector<2x96xf32>
    %225 = vector.extract_strided_slice %218 {offsets = [0, 96], sizes = [2, 32], strides = [1, 1]} : vector<2x128xf32> to vector<2x32xf32>
    %226 = math.tanh %225 : vector<2x32xf32>
    %227 = vector.extract_strided_slice %224 {offsets = [0, 32], sizes = [2, 32], strides = [1, 1]} : vector<2x96xf32> to vector<2x32xf32>
    %228 = arith.mulf %227, %212 : vector<2x32xf32>
    %229 = vector.extract_strided_slice %224 {offsets = [0, 0], sizes = [2, 32], strides = [1, 1]} : vector<2x96xf32> to vector<2x32xf32>
    %230 = arith.mulf %229, %226 : vector<2x32xf32>
    %231 = arith.addf %228, %230 : vector<2x32xf32>
    %232 = vector.extract_strided_slice %224 {offsets = [0, 64], sizes = [2, 32], strides = [1, 1]} : vector<2x96xf32> to vector<2x32xf32>
    %233 = math.tanh %231 : vector<2x32xf32>
    %234 = arith.mulf %232, %233 : vector<2x32xf32>
    %235 = vector.extract_strided_slice %175 {offsets = [6, 0], sizes = [2, 128], strides = [1, 1]} : vector<16x128xf32> to vector<2x128xf32>
    %cst_51 = arith.constant dense<0.000000e+00> : vector<2x128xf32>
    %236 = tpu.matmul %234, %171, %cst_51 {dimension_numbers = #tpu.dot_dimension_numbers<[1], [0], [0], [1], [0, 0, 1, 1], [], []>} : vector<2x32xf32>, vector<32x128xf32>, vector<2x128xf32> -> vector<2x128xf32>
    %237 = arith.addf %235, %236 : vector<2x128xf32>
    %238 = vector.extract_strided_slice %237 {offsets = [0, 0], sizes = [2, 96], strides = [1, 1]} : vector<2x128xf32> to vector<2x96xf32>
    %239 = arith.negf %238 : vector<2x96xf32>
    %240 = math.exp %239 : vector<2x96xf32>
    %cst_52 = arith.constant 1.000000e+00 : f32
    %241 = vector.broadcast %cst_52 : f32 to vector<2x96xf32>
    %242 = arith.addf %241, %240 : vector<2x96xf32>
    %243 = arith.divf %241, %242 : vector<2x96xf32>
    %244 = vector.extract_strided_slice %237 {offsets = [0, 96], sizes = [2, 32], strides = [1, 1]} : vector<2x128xf32> to vector<2x32xf32>
    %245 = math.tanh %244 : vector<2x32xf32>
    %246 = vector.extract_strided_slice %243 {offsets = [0, 32], sizes = [2, 32], strides = [1, 1]} : vector<2x96xf32> to vector<2x32xf32>
    %247 = arith.mulf %246, %231 : vector<2x32xf32>
    %248 = vector.extract_strided_slice %243 {offsets = [0, 0], sizes = [2, 32], strides = [1, 1]} : vector<2x96xf32> to vector<2x32xf32>
    %249 = arith.mulf %248, %245 : vector<2x32xf32>
    %250 = arith.addf %247, %249 : vector<2x32xf32>
    %251 = vector.extract_strided_slice %243 {offsets = [0, 64], sizes = [2, 32], strides = [1, 1]} : vector<2x96xf32> to vector<2x32xf32>
    %252 = math.tanh %250 : vector<2x32xf32>
    %253 = arith.mulf %251, %252 : vector<2x32xf32>
    %254 = vector.extract_strided_slice %175 {offsets = [8, 0], sizes = [2, 128], strides = [1, 1]} : vector<16x128xf32> to vector<2x128xf32>
    %cst_53 = arith.constant dense<0.000000e+00> : vector<2x128xf32>
    %255 = tpu.matmul %253, %171, %cst_53 {dimension_numbers = #tpu.dot_dimension_numbers<[1], [0], [0], [1], [0, 0, 1, 1], [], []>} : vector<2x32xf32>, vector<32x128xf32>, vector<2x128xf32> -> vector<2x128xf32>
    %256 = arith.addf %254, %255 : vector<2x128xf32>
    %257 = vector.extract_strided_slice %256 {offsets = [0, 0], sizes = [2, 96], strides = [1, 1]} : vector<2x128xf32> to vector<2x96xf32>
    %258 = arith.negf %257 : vector<2x96xf32>
    %259 = math.exp %258 : vector<2x96xf32>
    %cst_54 = arith.constant 1.000000e+00 : f32
    %260 = vector.broadcast %cst_54 : f32 to vector<2x96xf32>
    %261 = arith.addf %260, %259 : vector<2x96xf32>
    %262 = arith.divf %260, %261 : vector<2x96xf32>
    %263 = vector.extract_strided_slice %256 {offsets = [0, 96], sizes = [2, 32], strides = [1, 1]} : vector<2x128xf32> to vector<2x32xf32>
    %264 = math.tanh %263 : vector<2x32xf32>
    %265 = vector.extract_strided_slice %262 {offsets = [0, 32], sizes = [2, 32], strides = [1, 1]} : vector<2x96xf32> to vector<2x32xf32>
    %266 = arith.mulf %265, %250 : vector<2x32xf32>
    %267 = vector.extract_strided_slice %262 {offsets = [0, 0], sizes = [2, 32], strides = [1, 1]} : vector<2x96xf32> to vector<2x32xf32>
    %268 = arith.mulf %267, %264 : vector<2x32xf32>
    %269 = arith.addf %266, %268 : vector<2x32xf32>
    %270 = vector.extract_strided_slice %262 {offsets = [0, 64], sizes = [2, 32], strides = [1, 1]} : vector<2x96xf32> to vector<2x32xf32>
    %271 = math.tanh %269 : vector<2x32xf32>
    %272 = arith.mulf %270, %271 : vector<2x32xf32>
    %273 = vector.extract_strided_slice %175 {offsets = [10, 0], sizes = [2, 128], strides = [1, 1]} : vector<16x128xf32> to vector<2x128xf32>
    %cst_55 = arith.constant dense<0.000000e+00> : vector<2x128xf32>
    %274 = tpu.matmul %272, %171, %cst_55 {dimension_numbers = #tpu.dot_dimension_numbers<[1], [0], [0], [1], [0, 0, 1, 1], [], []>} : vector<2x32xf32>, vector<32x128xf32>, vector<2x128xf32> -> vector<2x128xf32>
    %275 = arith.addf %273, %274 : vector<2x128xf32>
    %276 = vector.extract_strided_slice %275 {offsets = [0, 0], sizes = [2, 96], strides = [1, 1]} : vector<2x128xf32> to vector<2x96xf32>
    %277 = arith.negf %276 : vector<2x96xf32>
    %278 = math.exp %277 : vector<2x96xf32>
    %cst_56 = arith.constant 1.000000e+00 : f32
    %279 = vector.broadcast %cst_56 : f32 to vector<2x96xf32>
    %280 = arith.addf %279, %278 : vector<2x96xf32>
    %281 = arith.divf %279, %280 : vector<2x96xf32>
    %282 = vector.extract_strided_slice %275 {offsets = [0, 96], sizes = [2, 32], strides = [1, 1]} : vector<2x128xf32> to vector<2x32xf32>
    %283 = math.tanh %282 : vector<2x32xf32>
    %284 = vector.extract_strided_slice %281 {offsets = [0, 32], sizes = [2, 32], strides = [1, 1]} : vector<2x96xf32> to vector<2x32xf32>
    %285 = arith.mulf %284, %269 : vector<2x32xf32>
    %286 = vector.extract_strided_slice %281 {offsets = [0, 0], sizes = [2, 32], strides = [1, 1]} : vector<2x96xf32> to vector<2x32xf32>
    %287 = arith.mulf %286, %283 : vector<2x32xf32>
    %288 = arith.addf %285, %287 : vector<2x32xf32>
    %289 = vector.extract_strided_slice %281 {offsets = [0, 64], sizes = [2, 32], strides = [1, 1]} : vector<2x96xf32> to vector<2x32xf32>
    %290 = math.tanh %288 : vector<2x32xf32>
    %291 = arith.mulf %289, %290 : vector<2x32xf32>
    %292 = vector.extract_strided_slice %175 {offsets = [12, 0], sizes = [2, 128], strides = [1, 1]} : vector<16x128xf32> to vector<2x128xf32>
    %cst_57 = arith.constant dense<0.000000e+00> : vector<2x128xf32>
    %293 = tpu.matmul %291, %171, %cst_57 {dimension_numbers = #tpu.dot_dimension_numbers<[1], [0], [0], [1], [0, 0, 1, 1], [], []>} : vector<2x32xf32>, vector<32x128xf32>, vector<2x128xf32> -> vector<2x128xf32>
    %294 = arith.addf %292, %293 : vector<2x128xf32>
    %295 = vector.extract_strided_slice %294 {offsets = [0, 0], sizes = [2, 96], strides = [1, 1]} : vector<2x128xf32> to vector<2x96xf32>
    %296 = arith.negf %295 : vector<2x96xf32>
    %297 = math.exp %296 : vector<2x96xf32>
    %cst_58 = arith.constant 1.000000e+00 : f32
    %298 = vector.broadcast %cst_58 : f32 to vector<2x96xf32>
    %299 = arith.addf %298, %297 : vector<2x96xf32>
    %300 = arith.divf %298, %299 : vector<2x96xf32>
    %301 = vector.extract_strided_slice %294 {offsets = [0, 96], sizes = [2, 32], strides = [1, 1]} : vector<2x128xf32> to vector<2x32xf32>
    %302 = math.tanh %301 : vector<2x32xf32>
    %303 = vector.extract_strided_slice %300 {offsets = [0, 32], sizes = [2, 32], strides = [1, 1]} : vector<2x96xf32> to vector<2x32xf32>
    %304 = arith.mulf %303, %288 : vector<2x32xf32>
    %305 = vector.extract_strided_slice %300 {offsets = [0, 0], sizes = [2, 32], strides = [1, 1]} : vector<2x96xf32> to vector<2x32xf32>
    %306 = arith.mulf %305, %302 : vector<2x32xf32>
    %307 = arith.addf %304, %306 : vector<2x32xf32>
    %308 = vector.extract_strided_slice %300 {offsets = [0, 64], sizes = [2, 32], strides = [1, 1]} : vector<2x96xf32> to vector<2x32xf32>
    %309 = math.tanh %307 : vector<2x32xf32>
    %310 = arith.mulf %308, %309 : vector<2x32xf32>
    %311 = vector.extract_strided_slice %175 {offsets = [14, 0], sizes = [2, 128], strides = [1, 1]} : vector<16x128xf32> to vector<2x128xf32>
    %cst_59 = arith.constant dense<0.000000e+00> : vector<2x128xf32>
    %312 = tpu.matmul %310, %171, %cst_59 {dimension_numbers = #tpu.dot_dimension_numbers<[1], [0], [0], [1], [0, 0, 1, 1], [], []>} : vector<2x32xf32>, vector<32x128xf32>, vector<2x128xf32> -> vector<2x128xf32>
    %313 = arith.addf %311, %312 : vector<2x128xf32>
    %314 = vector.extract_strided_slice %313 {offsets = [0, 0], sizes = [2, 96], strides = [1, 1]} : vector<2x128xf32> to vector<2x96xf32>
    %315 = arith.negf %314 : vector<2x96xf32>
    %316 = math.exp %315 : vector<2x96xf32>
    %cst_60 = arith.constant 1.000000e+00 : f32
    %317 = vector.broadcast %cst_60 : f32 to vector<2x96xf32>
    %318 = arith.addf %317, %316 : vector<2x96xf32>
    %319 = arith.divf %317, %318 : vector<2x96xf32>
    %320 = vector.extract_strided_slice %313 {offsets = [0, 96], sizes = [2, 32], strides = [1, 1]} : vector<2x128xf32> to vector<2x32xf32>
    %321 = math.tanh %320 : vector<2x32xf32>
    %322 = vector.extract_strided_slice %319 {offsets = [0, 32], sizes = [2, 32], strides = [1, 1]} : vector<2x96xf32> to vector<2x32xf32>
    %323 = arith.mulf %322, %307 : vector<2x32xf32>
    %324 = vector.extract_strided_slice %319 {offsets = [0, 0], sizes = [2, 32], strides = [1, 1]} : vector<2x96xf32> to vector<2x32xf32>
    %325 = arith.mulf %324, %321 : vector<2x32xf32>
    %326 = arith.addf %323, %325 : vector<2x32xf32>
    %327 = vector.extract_strided_slice %319 {offsets = [0, 64], sizes = [2, 32], strides = [1, 1]} : vector<2x96xf32> to vector<2x32xf32>
    %328 = math.tanh %326 : vector<2x32xf32>
    %329 = arith.mulf %327, %328 : vector<2x32xf32>
    %c0_61 = arith.constant 0 : index
    %c0_62 = arith.constant 0 : index
    %330 = vector.load %arg7[%c0_61, %c0_62] : memref<1x32xf32, #tpu.memory_space<vmem>>, vector<1x32xf32>
    %c0_63 = arith.constant 0 : index
    %c0_64 = arith.constant 0 : index
    %331 = vector.load %arg8[%c0_63, %c0_64] : memref<1x1xf32, #tpu.memory_space<vmem>>, vector<1x1xf32>
    %332 = vector.broadcast %330 : vector<1x32xf32> to vector<2x32xf32>
    %333 = arith.mulf %196, %332 : vector<2x32xf32>
    %cst_65 = arith.constant dense<0.000000e+00> : vector<2xf32>
    %334 = vector.multi_reduction <add>, %333, %cst_65 [1] : vector<2x32xf32> to vector<2xf32>
    %335 = vector.shape_cast %334 : vector<2xf32> to vector<2x1xf32>
    %336 = vector.broadcast %331 : vector<1x1xf32> to vector<2x1xf32>
    %337 = arith.addf %335, %336 : vector<2x1xf32>
    %338 = vector.broadcast %330 : vector<1x32xf32> to vector<2x32xf32>
    %339 = arith.mulf %215, %338 : vector<2x32xf32>
    %cst_66 = arith.constant dense<0.000000e+00> : vector<2xf32>
    %340 = vector.multi_reduction <add>, %339, %cst_66 [1] : vector<2x32xf32> to vector<2xf32>
    %341 = vector.shape_cast %340 : vector<2xf32> to vector<2x1xf32>
    %342 = vector.broadcast %331 : vector<1x1xf32> to vector<2x1xf32>
    %343 = arith.addf %341, %342 : vector<2x1xf32>
    %344 = vector.broadcast %330 : vector<1x32xf32> to vector<2x32xf32>
    %345 = arith.mulf %234, %344 : vector<2x32xf32>
    %cst_67 = arith.constant dense<0.000000e+00> : vector<2xf32>
    %346 = vector.multi_reduction <add>, %345, %cst_67 [1] : vector<2x32xf32> to vector<2xf32>
    %347 = vector.shape_cast %346 : vector<2xf32> to vector<2x1xf32>
    %348 = vector.broadcast %331 : vector<1x1xf32> to vector<2x1xf32>
    %349 = arith.addf %347, %348 : vector<2x1xf32>
    %350 = vector.broadcast %330 : vector<1x32xf32> to vector<2x32xf32>
    %351 = arith.mulf %253, %350 : vector<2x32xf32>
    %cst_68 = arith.constant dense<0.000000e+00> : vector<2xf32>
    %352 = vector.multi_reduction <add>, %351, %cst_68 [1] : vector<2x32xf32> to vector<2xf32>
    %353 = vector.shape_cast %352 : vector<2xf32> to vector<2x1xf32>
    %354 = vector.broadcast %331 : vector<1x1xf32> to vector<2x1xf32>
    %355 = arith.addf %353, %354 : vector<2x1xf32>
    %356 = vector.broadcast %330 : vector<1x32xf32> to vector<2x32xf32>
    %357 = arith.mulf %272, %356 : vector<2x32xf32>
    %cst_69 = arith.constant dense<0.000000e+00> : vector<2xf32>
    %358 = vector.multi_reduction <add>, %357, %cst_69 [1] : vector<2x32xf32> to vector<2xf32>
    %359 = vector.shape_cast %358 : vector<2xf32> to vector<2x1xf32>
    %360 = vector.broadcast %331 : vector<1x1xf32> to vector<2x1xf32>
    %361 = arith.addf %359, %360 : vector<2x1xf32>
    %362 = vector.broadcast %330 : vector<1x32xf32> to vector<2x32xf32>
    %363 = arith.mulf %291, %362 : vector<2x32xf32>
    %cst_70 = arith.constant dense<0.000000e+00> : vector<2xf32>
    %364 = vector.multi_reduction <add>, %363, %cst_70 [1] : vector<2x32xf32> to vector<2xf32>
    %365 = vector.shape_cast %364 : vector<2xf32> to vector<2x1xf32>
    %366 = vector.broadcast %331 : vector<1x1xf32> to vector<2x1xf32>
    %367 = arith.addf %365, %366 : vector<2x1xf32>
    %368 = vector.broadcast %330 : vector<1x32xf32> to vector<2x32xf32>
    %369 = arith.mulf %310, %368 : vector<2x32xf32>
    %cst_71 = arith.constant dense<0.000000e+00> : vector<2xf32>
    %370 = vector.multi_reduction <add>, %369, %cst_71 [1] : vector<2x32xf32> to vector<2xf32>
    %371 = vector.shape_cast %370 : vector<2xf32> to vector<2x1xf32>
    %372 = vector.broadcast %331 : vector<1x1xf32> to vector<2x1xf32>
    %373 = arith.addf %371, %372 : vector<2x1xf32>
    %374 = vector.broadcast %330 : vector<1x32xf32> to vector<2x32xf32>
    %375 = arith.mulf %329, %374 : vector<2x32xf32>
    %cst_72 = arith.constant dense<0.000000e+00> : vector<2xf32>
    %376 = vector.multi_reduction <add>, %375, %cst_72 [1] : vector<2x32xf32> to vector<2xf32>
    %377 = vector.shape_cast %376 : vector<2xf32> to vector<2x1xf32>
    %378 = vector.broadcast %331 : vector<1x1xf32> to vector<2x1xf32>
    %379 = arith.addf %377, %378 : vector<2x1xf32>
    %380 = arith.maximumf %337, %343 : vector<2x1xf32>
    %381 = arith.maximumf %380, %349 : vector<2x1xf32>
    %382 = arith.maximumf %381, %355 : vector<2x1xf32>
    %383 = arith.maximumf %382, %361 : vector<2x1xf32>
    %384 = arith.maximumf %383, %367 : vector<2x1xf32>
    %385 = arith.maximumf %384, %373 : vector<2x1xf32>
    %386 = arith.maximumf %385, %379 : vector<2x1xf32>
    %387 = arith.subf %337, %386 : vector<2x1xf32>
    %388 = math.exp %387 : vector<2x1xf32>
    %389 = arith.subf %343, %386 : vector<2x1xf32>
    %390 = math.exp %389 : vector<2x1xf32>
    %391 = arith.subf %349, %386 : vector<2x1xf32>
    %392 = math.exp %391 : vector<2x1xf32>
    %393 = arith.subf %355, %386 : vector<2x1xf32>
    %394 = math.exp %393 : vector<2x1xf32>
    %395 = arith.subf %361, %386 : vector<2x1xf32>
    %396 = math.exp %395 : vector<2x1xf32>
    %397 = arith.subf %367, %386 : vector<2x1xf32>
    %398 = math.exp %397 : vector<2x1xf32>
    %399 = arith.subf %373, %386 : vector<2x1xf32>
    %400 = math.exp %399 : vector<2x1xf32>
    %401 = arith.subf %379, %386 : vector<2x1xf32>
    %402 = math.exp %401 : vector<2x1xf32>
    %403 = arith.addf %388, %390 : vector<2x1xf32>
    %404 = arith.addf %403, %392 : vector<2x1xf32>
    %405 = arith.addf %404, %394 : vector<2x1xf32>
    %406 = arith.addf %405, %396 : vector<2x1xf32>
    %407 = arith.addf %406, %398 : vector<2x1xf32>
    %408 = arith.addf %407, %400 : vector<2x1xf32>
    %409 = arith.addf %408, %402 : vector<2x1xf32>
    %410 = arith.divf %388, %409 : vector<2x1xf32>
    %411 = vector.broadcast %410 : vector<2x1xf32> to vector<2x32xf32>
    %412 = arith.mulf %411, %196 : vector<2x32xf32>
    %c0_73 = arith.constant 0 : index
    %c0_74 = arith.constant 0 : index
    %413 = vector.load %arg13[%c0_73, %c0_74] : memref<2x256xf32, #tpu.memory_space<vmem>>, vector<2x32xf32>
    tpu.vector_store %arg13[%c0_73, %c0_74], %412 {strides = array<i32>} : memref<2x256xf32, #tpu.memory_space<vmem>>, vector<2x32xf32>,
    %414 = arith.divf %390, %409 : vector<2x1xf32>
    %415 = vector.broadcast %414 : vector<2x1xf32> to vector<2x32xf32>
    %416 = arith.mulf %415, %215 : vector<2x32xf32>
    %c0_75 = arith.constant 0 : index
    %c32 = arith.constant 32 : index
    %417 = vector.load %arg13[%c0_75, %c32] : memref<2x256xf32, #tpu.memory_space<vmem>>, vector<2x32xf32>
    tpu.vector_store %arg13[%c0_75, %c32], %416 {strides = array<i32>} : memref<2x256xf32, #tpu.memory_space<vmem>>, vector<2x32xf32>,
    %418 = arith.divf %392, %409 : vector<2x1xf32>
    %419 = vector.broadcast %418 : vector<2x1xf32> to vector<2x32xf32>
    %420 = arith.mulf %419, %234 : vector<2x32xf32>
    %c0_76 = arith.constant 0 : index
    %c64 = arith.constant 64 : index
    %421 = vector.load %arg13[%c0_76, %c64] : memref<2x256xf32, #tpu.memory_space<vmem>>, vector<2x32xf32>
    tpu.vector_store %arg13[%c0_76, %c64], %420 {strides = array<i32>} : memref<2x256xf32, #tpu.memory_space<vmem>>, vector<2x32xf32>,
    %422 = arith.divf %394, %409 : vector<2x1xf32>
    %423 = vector.broadcast %422 : vector<2x1xf32> to vector<2x32xf32>
    %424 = arith.mulf %423, %253 : vector<2x32xf32>
    %c0_77 = arith.constant 0 : index
    %c96 = arith.constant 96 : index
    %425 = vector.load %arg13[%c0_77, %c96] : memref<2x256xf32, #tpu.memory_space<vmem>>, vector<2x32xf32>
    tpu.vector_store %arg13[%c0_77, %c96], %424 {strides = array<i32>} : memref<2x256xf32, #tpu.memory_space<vmem>>, vector<2x32xf32>,
    %426 = arith.divf %396, %409 : vector<2x1xf32>
    %427 = vector.broadcast %426 : vector<2x1xf32> to vector<2x32xf32>
    %428 = arith.mulf %427, %272 : vector<2x32xf32>
    %c0_78 = arith.constant 0 : index
    %c128 = arith.constant 128 : index
    %429 = vector.load %arg13[%c0_78, %c128] : memref<2x256xf32, #tpu.memory_space<vmem>>, vector<2x32xf32>
    tpu.vector_store %arg13[%c0_78, %c128], %428 {strides = array<i32>} : memref<2x256xf32, #tpu.memory_space<vmem>>, vector<2x32xf32>,
    %430 = arith.divf %398, %409 : vector<2x1xf32>
    %431 = vector.broadcast %430 : vector<2x1xf32> to vector<2x32xf32>
    %432 = arith.mulf %431, %291 : vector<2x32xf32>
    %c0_79 = arith.constant 0 : index
    %c160 = arith.constant 160 : index
    %433 = vector.load %arg13[%c0_79, %c160] : memref<2x256xf32, #tpu.memory_space<vmem>>, vector<2x32xf32>
    tpu.vector_store %arg13[%c0_79, %c160], %432 {strides = array<i32>} : memref<2x256xf32, #tpu.memory_space<vmem>>, vector<2x32xf32>,
    %434 = arith.divf %400, %409 : vector<2x1xf32>
    %435 = vector.broadcast %434 : vector<2x1xf32> to vector<2x32xf32>
    %436 = arith.mulf %435, %310 : vector<2x32xf32>
    %c0_80 = arith.constant 0 : index
    %c192 = arith.constant 192 : index
    %437 = vector.load %arg13[%c0_80, %c192] : memref<2x256xf32, #tpu.memory_space<vmem>>, vector<2x32xf32>
    tpu.vector_store %arg13[%c0_80, %c192], %436 {strides = array<i32>} : memref<2x256xf32, #tpu.memory_space<vmem>>, vector<2x32xf32>,
    %438 = arith.divf %402, %409 : vector<2x1xf32>
    %439 = vector.broadcast %438 : vector<2x1xf32> to vector<2x32xf32>
    %440 = arith.mulf %439, %329 : vector<2x32xf32>
    %c0_81 = arith.constant 0 : index
    %c224 = arith.constant 224 : index
    %441 = vector.load %arg13[%c0_81, %c224] : memref<2x256xf32, #tpu.memory_space<vmem>>, vector<2x32xf32>
    tpu.vector_store %arg13[%c0_81, %c224], %440 {strides = array<i32>} : memref<2x256xf32, #tpu.memory_space<vmem>>, vector<2x32xf32>,
    %c0_82 = arith.constant 0 : index
    %c0_83 = arith.constant 0 : index
    %442 = vector.load %arg13[%c0_82, %c0_83] : memref<2x256xf32, #tpu.memory_space<vmem>>, vector<2x256xf32>
    %c0_84 = arith.constant 0 : index
    %c0_85 = arith.constant 0 : index
    %443 = vector.load %arg9[%c0_84, %c0_85] : memref<256x8xf32, #tpu.memory_space<vmem>>, vector<256x8xf32>
    %cst_86 = arith.constant dense<0.000000e+00> : vector<2x8xf32>
    %444 = tpu.matmul %442, %443, %cst_86 {dimension_numbers = #tpu.dot_dimension_numbers<[1], [0], [0], [1], [0, 0, 1, 1], [], []>} : vector<2x256xf32>, vector<256x8xf32>, vector<2x8xf32> -> vector<2x8xf32>
    %c0_87 = arith.constant 0 : index
    %c0_88 = arith.constant 0 : index
    %445 = vector.load %arg10[%c0_87, %c0_88] : memref<1x8xf32, #tpu.memory_space<vmem>>, vector<1x8xf32>
    %446 = vector.broadcast %445 : vector<1x8xf32> to vector<2x8xf32>
    %447 = arith.addf %444, %446 : vector<2x8xf32>
    %c0_89 = arith.constant 0 : index
    %c0_90 = arith.constant 0 : index
    %448 = vector.load %arg11[%c0_89, %c0_90] : memref<2x8xf32, #tpu.memory_space<vmem>>, vector<2x8xf32>
    tpu.vector_store %arg11[%c0_89, %c0_90], %447 {strides = array<i32>} : memref<2x8xf32, #tpu.memory_space<vmem>>, vector<2x8xf32>,
    return
  }
}

</mosaic_0001>

<llo_original>
// kernel: tpu_custom_call.1
$region0: #{tpu_custom_call.1}
  #allocation0 [shape = 'u32[]', space=smem, size = 0x4, offset = 0x4, fixed_abs, tag = 'smem constant byte address 0x4 - core index']
  #allocation1 [shape = 'u32[144,128]{1,0:T(1,128)}', space=vmem, size = 0x12000, scoped, tag = 'internal scratch']
  #allocation2 [shape = 'f32[16,32]{1,0:T(8,128)}', space=vmem, size = 0x2000, scoped, tag = 'scratch operand']
  #allocation3 [shape = 'f32[2,256]{1,0:T(2,128)}', space=vmem, size = 0x800, scoped, tag = 'scratch operand']
  #allocation4 [shape = 'f32[1,1]{1,0:T(1,128)S(1)}', space=vmem, size = 0x200, scoped, tag = 'scoped memory for tpu_custom_call.1']
  %s0 = inlined_call_operand.vmem [shape: f32[16,4], index: 0, kind: input, shape index: {}]
  %s1 = inlined_call_operand.vmem [shape: f32[4,128], index: 1, kind: input, shape index: {}]
  %s2 = inlined_call_operand.vmem [shape: f32[32,128], index: 2, kind: input, shape index: {}]
  %s3 = inlined_call_operand.vmem [shape: f32[1,128], index: 3, kind: input, shape index: {}]
  %s4 = inlined_call_operand.vmem [shape: f32[32,128], index: 4, kind: input, shape index: {}]
  %s5 = inlined_call_operand.vmem [shape: f32[32,128], index: 5, kind: input, shape index: {}]
  %s6 = inlined_call_operand.vmem [shape: f32[1,128], index: 6, kind: input, shape index: {}]
  %s7 = inlined_call_operand.vmem [shape: f32[1,32], index: 7, kind: input, shape index: {}]
  %s8 = inlined_call_operand.<no memory space> [shape: f32[1,1], index: 8, kind: input, shape index: {}]
  %s9 = inlined_call_operand.vmem [shape: f32[256,8], index: 9, kind: input, shape index: {}]
  %s10 = inlined_call_operand.vmem [shape: f32[1,8], index: 10, kind: input, shape index: {}]
  %s11 = inlined_call_operand.hbm [shape: f32[2,8], index: 11, kind: output, shape index: {}]
  %s12 = sld [smem:[#allocation0]]
  $region54: #{tpu_custom_call.1} parent=0
    _
  %s14 = ssub.s32 1, %s12
  %s15 = scalar_select 0, %s14, %s12
  %v16 = vstv %s8
  %17 = vst [vmem:[#allocation4] sm:$0x1] %v16
  $region1: #{tpu_custom_call.1} parent=0
    #allocation5 [shape = 'u8[1024]{0}', space=vmem, size = 0x400, scoped, tag = 'output window, operand 0, single buffered']
    #allocation6 [shape = 's32[1]{0}', space=sflag, size = 0x4, scoped, tag = 'scoped memory for tpu_custom_call.1']
    %18 = vsyncpa [#allocation6], 0
    // Predicated region
    $region2: #{tpu_custom_call.1} parent=1 // pred_check
      _
    $region3: #{tpu_custom_call.1} parent=1 // pred_check_branch
      %20 = sbr.rel (0) target = $region5
    $region4: #{tpu_custom_call.1} parent=1 // pred_region
      _
    $region5: #{tpu_custom_call.1} parent=1 // pred_fallthru
      _
    // Predicated region
    $region6: #{tpu_custom_call.1} parent=1 // pred_check
      _
    $region7: #{tpu_custom_call.1} parent=1 // pred_check_branch
      %22 = sbr.rel (0) target = $region9
    $region8: #{tpu_custom_call.1} parent=1 // pred_region
      _
    $region9: #{tpu_custom_call.1} parent=1 // pred_fallthru
      _
    // Predicated region
    $region10: #{tpu_custom_call.1} parent=1 // pred_check
      _
    $region11: #{tpu_custom_call.1} parent=1 // pred_check_branch
      %24 = sbr.rel (0) target = $region13
    $region12: #{tpu_custom_call.1} parent=1 // pred_region
      _
    $region13: #{tpu_custom_call.1} parent=1 // pred_fallthru
      _
    // Predicated region
    $region14: #{tpu_custom_call.1} parent=1 // pred_check
      _
    $region15: #{tpu_custom_call.1} parent=1 // pred_check_branch
      %26 = sbr.rel (0) target = $region17
    $region16: #{tpu_custom_call.1} parent=1 // pred_region
      _
    $region17: #{tpu_custom_call.1} parent=1 // pred_fallthru
      _
    // Predicated region
    $region18: #{tpu_custom_call.1} parent=1 // pred_check
      _
    $region19: #{tpu_custom_call.1} parent=1 // pred_check_branch
      %28 = sbr.rel (0) target = $region21
    $region20: #{tpu_custom_call.1} parent=1 // pred_region
      _
    $region21: #{tpu_custom_call.1} parent=1 // pred_fallthru
      _
    // Predicated region
    $region22: #{tpu_custom_call.1} parent=1 // pred_check
      _
    $region23: #{tpu_custom_call.1} parent=1 // pred_check_branch
      %30 = sbr.rel (0) target = $region25
    $region24: #{tpu_custom_call.1} parent=1 // pred_region
      _
    $region25: #{tpu_custom_call.1} parent=1 // pred_fallthru
      _
    // Predicated region
    $region26: #{tpu_custom_call.1} parent=1 // pred_check
      _
    $region27: #{tpu_custom_call.1} parent=1 // pred_check_branch
      %32 = sbr.rel (0) target = $region29
    $region28: #{tpu_custom_call.1} parent=1 // pred_region
      _
    $region29: #{tpu_custom_call.1} parent=1 // pred_fallthru
      _
    // Predicated region
    $region30: #{tpu_custom_call.1} parent=1 // pred_check
      _
    $region31: #{tpu_custom_call.1} parent=1 // pred_check_branch
      %34 = sbr.rel (0) target = $region33
    $region32: #{tpu_custom_call.1} parent=1 // pred_region
      _
    $region33: #{tpu_custom_call.1} parent=1 // pred_fallthru
      _
    // Predicated region
    $region34: #{tpu_custom_call.1} parent=1 // pred_check
      _
    $region35: #{tpu_custom_call.1} parent=1 // pred_check_branch
      %36 = sbr.rel (0) target = $region37
    $region36: #{tpu_custom_call.1} parent=1 // pred_region
      _
    $region37: #{tpu_custom_call.1} parent=1 // pred_fallthru
      _
    // Predicated region
    $region38: #{tpu_custom_call.1} parent=1 // pred_check
      _
    $region39: #{tpu_custom_call.1} parent=1 // pred_check_branch
      %38 = sbr.rel (0) target = $region41
    $region40: #{tpu_custom_call.1} parent=1 // pred_region
      _
    $region41: #{tpu_custom_call.1} parent=1 // pred_fallthru
      _
    // Predicated region
    $region42: #{tpu_custom_call.1} parent=1 // pred_check
      _
    $region43: #{tpu_custom_call.1} parent=1 // pred_check_branch
      %40 = sbr.rel (0) target = $region45
    $region44: #{tpu_custom_call.1} parent=1 // pred_region
      _
    $region45: #{tpu_custom_call.1} parent=1 // pred_fallthru
      _
    %v41 = vld [vmem:[%s0] sm:$0xff]
    %v42 = vld [vmem:[%s0 + $0x8] sm:$0xff]
    %v43 = vld [vmem:[%s1] sm:$0xf]
    %v44 = vld [vmem:[%s2] sm:$0xff]
    %v45 = vld [vmem:[%s2 + $0x8] sm:$0xff]
    %v46 = vld [vmem:[%s2 + $0x10] sm:$0xff]
    %v47 = vld [vmem:[%s2 + $0x18] sm:$0xff]
    %v48 = vld [vmem:[%s3] sm:$0x1]
    %v50 = vlaneseq
    %v51 = vshrl.u32 %v50, 7
    %v52 = vsub.s32 0, %v51
    %v53 = vrot.slane %v48, %v52
    %vm55 = vcmask 31744
    %v57 = vsel %vm55, %v41, 0
    %v60 = vsel %vm55, %v42, 0
    %vm62 = vcmask 1043456
    %v64 = vsel %vm62, %v43, 0
    %66 = vmatprep.subr.mxu0 0.0
    %67 = vmatpush1.msra.mxu0 0.0
    %68 = vmatprep.subr.mxu0 0.0
    %69 = vmatpush1.msra.mxu0 0.0
    %70 = vmatprep.subr.mxu0 0.0
    %71 = vmatpush1.msra.mxu0 0.0
    %72 = vmatprep.subr.mxu0 0.0
    %73 = vmatpush1.msra.mxu0 0.0
    %74 = vmatprep.subr.mxu0 0.0
    %75 = vmatpush1.msra.mxu0 0.0
    %76 = vmatprep.subr.mxu0 0.0
    %77 = vmatpush1.msra.mxu0 0.0
    %78 = vmatprep.subr.mxu0 0.0
    %79 = vmatpush1.msra.mxu0 0.0
    %80 = vmatprep.subr.mxu0 0.0
    %81 = vmatpush1.msra.mxu0 0.0
    %82 = vmatprep.subr.mxu0 0.0
    %83 = vmatpush1.msra.mxu0 0.0
    %84 = vmatprep.subr.mxu0 0.0
    %85 = vmatpush1.msra.mxu0 0.0
    %86 = vmatprep.subr.mxu0 0.0
    %87 = vmatpush1.msra.mxu0 0.0
    %88 = vmatprep.subr.mxu0 0.0
    %89 = vmatpush1.msra.mxu0 0.0
    %90 = vmatprep.subr.mxu0 0.0
    %91 = vmatpush1.msra.mxu0 0.0
    %92 = vmatprep.subr.mxu0 0.0
    %93 = vmatpush1.msra.mxu0 0.0
    %94 = vmatprep.subr.mxu0 0.0
    %95 = vmatpush1.msra.mxu0 0.0
    %96 = vmatprep.subr.mxu0 0.0
    %97 = vmatpush1.msra.mxu0 %v64
    %98 = vmatprep.subr.mxu0 0.0
    %99 = vmatpush2.msra.mxu0 0.0
    %100 = vmatprep.subr.mxu0 0.0
    %101 = vmatpush2.msra.mxu0 0.0
    %102 = vmatprep.subr.mxu0 0.0
    %103 = vmatpush2.msra.mxu0 0.0
    %104 = vmatprep.subr.mxu0 0.0
    %105 = vmatpush2.msra.mxu0 0.0
    %106 = vmatprep.subr.mxu0 0.0
    %107 = vmatpush2.msra.mxu0 0.0
    %108 = vmatprep.subr.mxu0 0.0
    %109 = vmatpush2.msra.mxu0 0.0
    %110 = vmatprep.subr.mxu0 0.0
    %111 = vmatpush2.msra.mxu0 0.0
    %112 = vmatprep.subr.mxu0 0.0
    %113 = vmatpush2.msra.mxu0 0.0
    %114 = vmatprep.subr.mxu0 0.0
    %115 = vmatpush2.msra.mxu0 0.0
    %116 = vmatprep.subr.mxu0 0.0
    %117 = vmatpush2.msra.mxu0 0.0
    %118 = vmatprep.subr.mxu0 0.0
    %119 = vmatpush2.msra.mxu0 0.0
    %120 = vmatprep.subr.mxu0 0.0
    %121 = vmatpush2.msra.mxu0 0.0
    %122 = vmatprep.subr.mxu0 0.0
    %123 = vmatpush2.msra.mxu0 0.0
    %124 = vmatprep.subr.mxu0 0.0
    %125 = vmatpush2.msra.mxu0 0.0
    %126 = vmatprep.subr.mxu0 0.0
    %127 = vmatpush2.msra.mxu0 0.0
    %128 = vmatprep.subr.mxu0 0.0
    %129 = vmatpush2.msra.mxu0 0.0
    %130 = vmatprep.mubr.f32.mxu0 0.0
    %131 = vmatmul.mubr.f32.gmra.mxu0 %v57
    %v132 = vpop.f32.mrf.mxu0
    %v133 = vadd.f32 %v53, %v132
    %v134 = vpop.f32.mrf.mxu0
    %135 = vmatprep.mubr.f32.mxu0 0.0
    %136 = vmatmul.mubr.f32.gmra.mxu0 %v60
    %v137 = vpop.f32.mrf.mxu0
    %v138 = vadd.f32 %v53, %v137
    %v139 = vpop.f32.mrf.mxu0
    %140 = vdwg.mxu0
    %vm141 = vcmask 261120
    %v143 = vsel %vm141, 0.0, 0
    %145 = vmatprep.subr.mxu0 0.0
    %146 = vmatpush1.msra.mxu0 0.0
    %147 = vmatprep.subr.mxu0 0.0
    %148 = vmatpush1.msra.mxu0 0.0
    %149 = vmatprep.subr.mxu0 0.0
    %150 = vmatpush1.msra.mxu0 0.0
    %151 = vmatprep.subr.mxu0 0.0
    %152 = vmatpush1.msra.mxu0 0.0
    %153 = vmatprep.subr.mxu0 0.0
    %154 = vmatpush1.msra.mxu0 0.0
    %155 = vmatprep.subr.mxu0 0.0
    %156 = vmatpush1.msra.mxu0 0.0
    %157 = vmatprep.subr.mxu0 0.0
    %158 = vmatpush1.msra.mxu0 0.0
    %159 = vmatprep.subr.mxu0 0.0
    %160 = vmatpush1.msra.mxu0 0.0
    %161 = vmatprep.subr.mxu0 0.0
    %162 = vmatpush1.msra.mxu0 0.0
    %163 = vmatprep.subr.mxu0 0.0
    %164 = vmatpush1.msra.mxu0 0.0
    %165 = vmatprep.subr.mxu0 0.0
    %166 = vmatpush1.msra.mxu0 0.0
    %167 = vmatprep.subr.mxu0 0.0
    %168 = vmatpush1.msra.mxu0 0.0
    %169 = vmatprep.subr.mxu0 0.0
    %170 = vmatpush1.msra.mxu0 %v47
    %171 = vmatprep.subr.mxu0 0.0
    %172 = vmatpush1.msra.mxu0 %v46
    %173 = vmatprep.subr.mxu0 0.0
    %174 = vmatpush1.msra.mxu0 %v45
    %175 = vmatprep.subr.mxu0 0.0
    %176 = vmatpush1.msra.mxu0 %v44
    %177 = vmatprep.subr.mxu0 0.0
    %178 = vmatpush2.msra.mxu0 0.0
    %179 = vmatprep.subr.mxu0 0.0
    %180 = vmatpush2.msra.mxu0 0.0
    %181 = vmatprep.subr.mxu0 0.0
    %182 = vmatpush2.msra.mxu0 0.0
    %183 = vmatprep.subr.mxu0 0.0
    %184 = vmatpush2.msra.mxu0 0.0
    %185 = vmatprep.subr.mxu0 0.0
    %186 = vmatpush2.msra.mxu0 0.0
    %187 = vmatprep.subr.mxu0 0.0
    %188 = vmatpush2.msra.mxu0 0.0
    %189 = vmatprep.subr.mxu0 0.0
    %190 = vmatpush2.msra.mxu0 0.0
    %191 = vmatprep.subr.mxu0 0.0
    %192 = vmatpush2.msra.mxu0 0.0
    %193 = vmatprep.subr.mxu0 0.0
    %194 = vmatpush2.msra.mxu0 0.0
    %195 = vmatprep.subr.mxu0 0.0
    %196 = vmatpush2.msra.mxu0 0.0
    %197 = vmatprep.subr.mxu0 0.0
    %198 = vmatpush2.msra.mxu0 0.0
    %199 = vmatprep.subr.mxu0 0.0
    %200 = vmatpush2.msra.mxu0 0.0
    %201 = vmatprep.subr.mxu0 0.0
    %202 = vmatpush2.msra.mxu0 0.0
    %203 = vmatprep.subr.mxu0 0.0
    %204 = vmatpush2.msra.mxu0 0.0
    %205 = vmatprep.subr.mxu0 0.0
    %206 = vmatpush2.msra.mxu0 0.0
    %207 = vmatprep.subr.mxu0 0.0
    %208 = vmatpush2.msra.mxu0 0.0
    %209 = vmatprep.mubr.f32.mxu0 0.0
    %210 = vmatmul.mubr.f32.gmra.mxu0 %v143
    %v211 = vpop.f32.mrf.mxu0
    %v212 = vadd.f32 0.0, %v211
    %v213 = vpop.f32.mrf.mxu0
    %214 = vdwg.mxu0
    %v215 = vadd.f32 %v133, %v212
    %v216 = vxor.u32 %v215, 2147483648
    %v217 = vmul.f32 %v216, 1.442695
    %v218 = vpow.pop %v217
    %v219 = vadd.f32 %v218, 1.0
    %v220 = vrcp.pop %v219
    %v221 = vmul.f32 1.0, %v220
    %v222 = vtanh.pop %v215
    %v223 = vmul.f32 %v221, 0.0
    %225 = vrot.lane.b32.xlu0 %v222, 32
    %v226 = vpop.permute.xlu0 %225
    %v228 = vmul.f32 %v221, %v226
    %230 = vrot.lane.b32.xlu0 %v228, 32
    %v231 = vpop.permute.xlu0 %230
    %v233 = vadd.f32 %v223, %v231
    %v234 = vtanh.pop %v233
    %236 = vrot.lane.b32.xlu0 %v234, 32
    %v237 = vpop.permute.xlu0 %236
    %v239 = vmul.f32 %v221, %v237
    %241 = vrot.lane.b32.xlu0 %v239, 64
    %v242 = vpop.permute.xlu0 %241
    %vm244 = vcmask 254976
    %245 = vst.msk [vmem:[#allocation2] sm:$0x3] %vm244, %v242
    %v246 = vsel %vm141, %v242, 0
    %248 = vmatprep.subr.mxu0 0.0
    %249 = vmatpush1.msra.mxu0 0.0
    %250 = vmatprep.subr.mxu0 0.0
    %251 = vmatpush1.msra.mxu0 0.0
    %252 = vmatprep.subr.mxu0 0.0
    %253 = vmatpush1.msra.mxu0 0.0
    %254 = vmatprep.subr.mxu0 0.0
    %255 = vmatpush1.msra.mxu0 0.0
    %256 = vmatprep.subr.mxu0 0.0
    %257 = vmatpush1.msra.mxu0 0.0
    %258 = vmatprep.subr.mxu0 0.0
    %259 = vmatpush1.msra.mxu0 0.0
    %260 = vmatprep.subr.mxu0 0.0
    %261 = vmatpush1.msra.mxu0 0.0
    %262 = vmatprep.subr.mxu0 0.0
    %263 = vmatpush1.msra.mxu0 0.0
    %264 = vmatprep.subr.mxu0 0.0
    %265 = vmatpush1.msra.mxu0 0.0
    %266 = vmatprep.subr.mxu0 0.0
    %267 = vmatpush1.msra.mxu0 0.0
    %268 = vmatprep.subr.mxu0 0.0
    %269 = vmatpush1.msra.mxu0 0.0
    %270 = vmatprep.subr.mxu0 0.0
    %271 = vmatpush1.msra.mxu0 0.0
    %272 = vmatprep.subr.mxu0 0.0
    %273 = vmatpush1.msra.mxu0 %v47
    %274 = vmatprep.subr.mxu0 0.0
    %275 = vmatpush1.msra.mxu0 %v46
    %276 = vmatprep.subr.mxu0 0.0
    %277 = vmatpush1.msra.mxu0 %v45
    %278 = vmatprep.subr.mxu0 0.0
    %279 = vmatpush1.msra.mxu0 %v44
    %280 = vmatprep.subr.mxu0 0.0
    %281 = vmatpush2.msra.mxu0 0.0
    %282 = vmatprep.subr.mxu0 0.0
    %283 = vmatpush2.msra.mxu0 0.0
    %284 = vmatprep.subr.mxu0 0.0
    %285 = vmatpush2.msra.mxu0 0.0
    %286 = vmatprep.subr.mxu0 0.0
    %287 = vmatpush2.msra.mxu0 0.0
    %288 = vmatprep.subr.mxu0 0.0
    %289 = vmatpush2.msra.mxu0 0.0
    %290 = vmatprep.subr.mxu0 0.0
    %291 = vmatpush2.msra.mxu0 0.0
    %292 = vmatprep.subr.mxu0 0.0
    %293 = vmatpush2.msra.mxu0 0.0
    %294 = vmatprep.subr.mxu0 0.0
    %295 = vmatpush2.msra.mxu0 0.0
    %296 = vmatprep.subr.mxu0 0.0
    %297 = vmatpush2.msra.mxu0 0.0
    %298 = vmatprep.subr.mxu0 0.0
    %299 = vmatpush2.msra.mxu0 0.0
    %300 = vmatprep.subr.mxu0 0.0
    %301 = vmatpush2.msra.mxu0 0.0
    %302 = vmatprep.subr.mxu0 0.0
    %303 = vmatpush2.msra.mxu0 0.0
    %304 = vmatprep.subr.mxu0 0.0
    %305 = vmatpush2.msra.mxu0 0.0
    %306 = vmatprep.subr.mxu0 0.0
    %307 = vmatpush2.msra.mxu0 0.0
    %308 = vmatprep.subr.mxu0 0.0
    %309 = vmatpush2.msra.mxu0 0.0
    %310 = vmatprep.subr.mxu0 0.0
    %311 = vmatpush2.msra.mxu0 0.0
    %312 = vmatprep.mubr.f32.mxu0 0.0
    %313 = vmatmul.mubr.f32.gmra.mxu0 %v246
    %v314 = vpop.f32.mrf.mxu0
    %v315 = vadd.f32 0.0, %v314
    %v316 = vpop.f32.mrf.mxu0
    %317 = vdwg.mxu0
    %v319 = vrot.slane %v315, 6
    %v321 = vadd.f32 %v133, %v319
    %v322 = vxor.u32 %v321, 2147483648
    %v323 = vmul.f32 %v322, 1.442695
    %v324 = vpow.pop %v323
    %v325 = vadd.f32 %v324, 1.0
    %v326 = vrcp.pop %v325
    %v327 = vmul.f32 1.0, %v326
    %v328 = vtanh.pop %v321
    %v330 = vrot.slane %v233, 6
    %v332 = vmul.f32 %v327, %v330
    %334 = vrot.lane.b32.xlu0 %v328, 32
    %v335 = vpop.permute.xlu0 %334
    %v337 = vmul.f32 %v327, %v335
    %339 = vrot.lane.b32.xlu0 %v337, 32
    %v340 = vpop.permute.xlu0 %339
    %v342 = vadd.f32 %v332, %v340
    %v343 = vtanh.pop %v342
    %345 = vrot.lane.b32.xlu0 %v343, 32
    %v346 = vpop.permute.xlu0 %345
    %v348 = vmul.f32 %v327, %v346
    %350 = vrot.lane.b32.xlu0 %v348, 64
    %v351 = vpop.permute.xlu0 %350
    %vm353 = vcmask 257026
    %354 = vst.msk [vmem:[#allocation2] sm:$0xc] %vm353, %v351
    %v355 = vrot.slane %v348, 2
    %356 = vrot.lane.b32.xlu0 %v355, 64
    %v357 = vpop.permute.xlu0 %356
    %v358 = vsel %vm141, %v357, 0
    %360 = vmatprep.subr.mxu0 0.0
    %361 = vmatpush1.msra.mxu0 0.0
    %362 = vmatprep.subr.mxu0 0.0
    %363 = vmatpush1.msra.mxu0 0.0
    %364 = vmatprep.subr.mxu0 0.0
    %365 = vmatpush1.msra.mxu0 0.0
    %366 = vmatprep.subr.mxu0 0.0
    %367 = vmatpush1.msra.mxu0 0.0
    %368 = vmatprep.subr.mxu0 0.0
    %369 = vmatpush1.msra.mxu0 0.0
    %370 = vmatprep.subr.mxu0 0.0
    %371 = vmatpush1.msra.mxu0 0.0
    %372 = vmatprep.subr.mxu0 0.0
    %373 = vmatpush1.msra.mxu0 0.0
    %374 = vmatprep.subr.mxu0 0.0
    %375 = vmatpush1.msra.mxu0 0.0
    %376 = vmatprep.subr.mxu0 0.0
    %377 = vmatpush1.msra.mxu0 0.0
    %378 = vmatprep.subr.mxu0 0.0
    %379 = vmatpush1.msra.mxu0 0.0
    %380 = vmatprep.subr.mxu0 0.0
    %381 = vmatpush1.msra.mxu0 0.0
    %382 = vmatprep.subr.mxu0 0.0
    %383 = vmatpush1.msra.mxu0 0.0
    %384 = vmatprep.subr.mxu0 0.0
    %385 = vmatpush1.msra.mxu0 %v47
    %386 = vmatprep.subr.mxu0 0.0
    %387 = vmatpush1.msra.mxu0 %v46
    %388 = vmatprep.subr.mxu0 0.0
    %389 = vmatpush1.msra.mxu0 %v45
    %390 = vmatprep.subr.mxu0 0.0
    %391 = vmatpush1.msra.mxu0 %v44
    %392 = vmatprep.subr.mxu0 0.0
    %393 = vmatpush2.msra.mxu0 0.0
    %394 = vmatprep.subr.mxu0 0.0
    %395 = vmatpush2.msra.mxu0 0.0
    %396 = vmatprep.subr.mxu0 0.0
    %397 = vmatpush2.msra.mxu0 0.0
    %398 = vmatprep.subr.mxu0 0.0
    %399 = vmatpush2.msra.mxu0 0.0
    %400 = vmatprep.subr.mxu0 0.0
    %401 = vmatpush2.msra.mxu0 0.0
    %402 = vmatprep.subr.mxu0 0.0
    %403 = vmatpush2.msra.mxu0 0.0
    %404 = vmatprep.subr.mxu0 0.0
    %405 = vmatpush2.msra.mxu0 0.0
    %406 = vmatprep.subr.mxu0 0.0
    %407 = vmatpush2.msra.mxu0 0.0
    %408 = vmatprep.subr.mxu0 0.0
    %409 = vmatpush2.msra.mxu0 0.0
    %410 = vmatprep.subr.mxu0 0.0
    %411 = vmatpush2.msra.mxu0 0.0
    %412 = vmatprep.subr.mxu0 0.0
    %413 = vmatpush2.msra.mxu0 0.0
    %414 = vmatprep.subr.mxu0 0.0
    %415 = vmatpush2.msra.mxu0 0.0
    %416 = vmatprep.subr.mxu0 0.0
    %417 = vmatpush2.msra.mxu0 0.0
    %418 = vmatprep.subr.mxu0 0.0
    %419 = vmatpush2.msra.mxu0 0.0
    %420 = vmatprep.subr.mxu0 0.0
    %421 = vmatpush2.msra.mxu0 0.0
    %422 = vmatprep.subr.mxu0 0.0
    %423 = vmatpush2.msra.mxu0 0.0
    %424 = vmatprep.mubr.f32.mxu0 0.0
    %425 = vmatmul.mubr.f32.gmra.mxu0 %v358
    %v426 = vpop.f32.mrf.mxu0
    %v427 = vadd.f32 0.0, %v426
    %v428 = vpop.f32.mrf.mxu0
    %429 = vdwg.mxu0
    %v431 = vrot.slane %v427, 4
    %v433 = vadd.f32 %v133, %v431
    %v434 = vxor.u32 %v433, 2147483648
    %v435 = vmul.f32 %v434, 1.442695
    %v436 = vpow.pop %v435
    %v437 = vadd.f32 %v436, 1.0
    %v438 = vrcp.pop %v437
    %v439 = vmul.f32 1.0, %v438
    %v440 = vtanh.pop %v433
    %v442 = vrot.slane %v342, 6
    %v444 = vmul.f32 %v439, %v442
    %446 = vrot.lane.b32.xlu0 %v440, 32
    %v447 = vpop.permute.xlu0 %446
    %v449 = vmul.f32 %v439, %v447
    %451 = vrot.lane.b32.xlu0 %v449, 32
    %v452 = vpop.permute.xlu0 %451
    %v454 = vadd.f32 %v444, %v452
    %v455 = vtanh.pop %v454
    %457 = vrot.lane.b32.xlu0 %v455, 32
    %v458 = vpop.permute.xlu0 %457
    %v460 = vmul.f32 %v439, %v458
    %462 = vrot.lane.b32.xlu0 %v460, 64
    %v463 = vpop.permute.xlu0 %462
    %vm465 = vcmask 259076
    %466 = vst.msk [vmem:[#allocation2] sm:$0x30] %vm465, %v463
    %v467 = vrot.slane %v460, 4
    %468 = vrot.lane.b32.xlu0 %v467, 64
    %v469 = vpop.permute.xlu0 %468
    %v470 = vsel %vm141, %v469, 0
    %472 = vmatprep.subr.mxu0 0.0
    %473 = vmatpush1.msra.mxu0 0.0
    %474 = vmatprep.subr.mxu0 0.0
    %475 = vmatpush1.msra.mxu0 0.0
    %476 = vmatprep.subr.mxu0 0.0
    %477 = vmatpush1.msra.mxu0 0.0
    %478 = vmatprep.subr.mxu0 0.0
    %479 = vmatpush1.msra.mxu0 0.0
    %480 = vmatprep.subr.mxu0 0.0
    %481 = vmatpush1.msra.mxu0 0.0
    %482 = vmatprep.subr.mxu0 0.0
    %483 = vmatpush1.msra.mxu0 0.0
    %484 = vmatprep.subr.mxu0 0.0
    %485 = vmatpush1.msra.mxu0 0.0
    %486 = vmatprep.subr.mxu0 0.0
    %487 = vmatpush1.msra.mxu0 0.0
    %488 = vmatprep.subr.mxu0 0.0
    %489 = vmatpush1.msra.mxu0 0.0
    %490 = vmatprep.subr.mxu0 0.0
    %491 = vmatpush1.msra.mxu0 0.0
    %492 = vmatprep.subr.mxu0 0.0
    %493 = vmatpush1.msra.mxu0 0.0
    %494 = vmatprep.subr.mxu0 0.0
    %495 = vmatpush1.msra.mxu0 0.0
    %496 = vmatprep.subr.mxu0 0.0
    %497 = vmatpush1.msra.mxu0 %v47
    %498 = vmatprep.subr.mxu0 0.0
    %499 = vmatpush1.msra.mxu0 %v46
    %500 = vmatprep.subr.mxu0 0.0
    %501 = vmatpush1.msra.mxu0 %v45
    %502 = vmatprep.subr.mxu0 0.0
    %503 = vmatpush1.msra.mxu0 %v44
    %504 = vmatprep.subr.mxu0 0.0
    %505 = vmatpush2.msra.mxu0 0.0
    %506 = vmatprep.subr.mxu0 0.0
    %507 = vmatpush2.msra.mxu0 0.0
    %508 = vmatprep.subr.mxu0 0.0
    %509 = vmatpush2.msra.mxu0 0.0
    %510 = vmatprep.subr.mxu0 0.0
    %511 = vmatpush2.msra.mxu0 0.0
    %512 = vmatprep.subr.mxu0 0.0
    %513 = vmatpush2.msra.mxu0 0.0
    %514 = vmatprep.subr.mxu0 0.0
    %515 = vmatpush2.msra.mxu0 0.0
    %516 = vmatprep.subr.mxu0 0.0
    %517 = vmatpush2.msra.mxu0 0.0
    %518 = vmatprep.subr.mxu0 0.0
    %519 = vmatpush2.msra.mxu0 0.0
    %520 = vmatprep.subr.mxu0 0.0
    %521 = vmatpush2.msra.mxu0 0.0
    %522 = vmatprep.subr.mxu0 0.0
    %523 = vmatpush2.msra.mxu0 0.0
    %524 = vmatprep.subr.mxu0 0.0
    %525 = vmatpush2.msra.mxu0 0.0
    %526 = vmatprep.subr.mxu0 0.0
    %527 = vmatpush2.msra.mxu0 0.0
    %528 = vmatprep.subr.mxu0 0.0
    %529 = vmatpush2.msra.mxu0 0.0
    %530 = vmatprep.subr.mxu0 0.0
    %531 = vmatpush2.msra.mxu0 0.0
    %532 = vmatprep.subr.mxu0 0.0
    %533 = vmatpush2.msra.mxu0 0.0
    %534 = vmatprep.subr.mxu0 0.0
    %535 = vmatpush2.msra.mxu0 0.0
    %536 = vmatprep.mubr.f32.mxu0 0.0
    %537 = vmatmul.mubr.f32.gmra.mxu0 %v470
    %v538 = vpop.f32.mrf.mxu0
    %v539 = vadd.f32 0.0, %v538
    %v540 = vpop.f32.mrf.mxu0
    %541 = vdwg.mxu0
    %v543 = vrot.slane %v539, 2
    %v545 = vadd.f32 %v133, %v543
    %v546 = vxor.u32 %v545, 2147483648
    %v547 = vmul.f32 %v546, 1.442695
    %v548 = vpow.pop %v547
    %v549 = vadd.f32 %v548, 1.0
    %v550 = vrcp.pop %v549
    %v551 = vmul.f32 1.0, %v550
    %v552 = vtanh.pop %v545
    %v554 = vrot.slane %v454, 6
    %v556 = vmul.f32 %v551, %v554
    %558 = vrot.lane.b32.xlu0 %v552, 32
    %v559 = vpop.permute.xlu0 %558
    %v561 = vmul.f32 %v551, %v559
    %563 = vrot.lane.b32.xlu0 %v561, 32
    %v564 = vpop.permute.xlu0 %563
    %v566 = vadd.f32 %v556, %v564
    %v567 = vtanh.pop %v566
    %569 = vrot.lane.b32.xlu0 %v567, 32
    %v570 = vpop.permute.xlu0 %569
    %v572 = vmul.f32 %v551, %v570
    %574 = vrot.lane.b32.xlu0 %v572, 64
    %v575 = vpop.permute.xlu0 %574
    %vm577 = vcmask 261126
    %578 = vst.msk [vmem:[#allocation2] sm:$0xc0] %vm577, %v575
    %v579 = vrot.slane %v572, 6
    %580 = vrot.lane.b32.xlu0 %v579, 64
    %v581 = vpop.permute.xlu0 %580
    %v582 = vsel %vm141, %v581, 0
    %584 = vmatprep.subr.mxu0 0.0
    %585 = vmatpush1.msra.mxu0 0.0
    %586 = vmatprep.subr.mxu0 0.0
    %587 = vmatpush1.msra.mxu0 0.0
    %588 = vmatprep.subr.mxu0 0.0
    %589 = vmatpush1.msra.mxu0 0.0
    %590 = vmatprep.subr.mxu0 0.0
    %591 = vmatpush1.msra.mxu0 0.0
    %592 = vmatprep.subr.mxu0 0.0
    %593 = vmatpush1.msra.mxu0 0.0
    %594 = vmatprep.subr.mxu0 0.0
    %595 = vmatpush1.msra.mxu0 0.0
    %596 = vmatprep.subr.mxu0 0.0
    %597 = vmatpush1.msra.mxu0 0.0
    %598 = vmatprep.subr.mxu0 0.0
    %599 = vmatpush1.msra.mxu0 0.0
    %600 = vmatprep.subr.mxu0 0.0
    %601 = vmatpush1.msra.mxu0 0.0
    %602 = vmatprep.subr.mxu0 0.0
    %603 = vmatpush1.msra.mxu0 0.0
    %604 = vmatprep.subr.mxu0 0.0
    %605 = vmatpush1.msra.mxu0 0.0
    %606 = vmatprep.subr.mxu0 0.0
    %607 = vmatpush1.msra.mxu0 0.0
    %608 = vmatprep.subr.mxu0 0.0
    %609 = vmatpush1.msra.mxu0 %v47
    %610 = vmatprep.subr.mxu0 0.0
    %611 = vmatpush1.msra.mxu0 %v46
    %612 = vmatprep.subr.mxu0 0.0
    %613 = vmatpush1.msra.mxu0 %v45
    %614 = vmatprep.subr.mxu0 0.0
    %615 = vmatpush1.msra.mxu0 %v44
    %616 = vmatprep.subr.mxu0 0.0
    %617 = vmatpush2.msra.mxu0 0.0
    %618 = vmatprep.subr.mxu0 0.0
    %619 = vmatpush2.msra.mxu0 0.0
    %620 = vmatprep.subr.mxu0 0.0
    %621 = vmatpush2.msra.mxu0 0.0
    %622 = vmatprep.subr.mxu0 0.0
    %623 = vmatpush2.msra.mxu0 0.0
    %624 = vmatprep.subr.mxu0 0.0
    %625 = vmatpush2.msra.mxu0 0.0
    %626 = vmatprep.subr.mxu0 0.0
    %627 = vmatpush2.msra.mxu0 0.0
    %628 = vmatprep.subr.mxu0 0.0
    %629 = vmatpush2.msra.mxu0 0.0
    %630 = vmatprep.subr.mxu0 0.0
    %631 = vmatpush2.msra.mxu0 0.0
    %632 = vmatprep.subr.mxu0 0.0
    %633 = vmatpush2.msra.mxu0 0.0
    %634 = vmatprep.subr.mxu0 0.0
    %635 = vmatpush2.msra.mxu0 0.0
    %636 = vmatprep.subr.mxu0 0.0
    %637 = vmatpush2.msra.mxu0 0.0
    %638 = vmatprep.subr.mxu0 0.0
    %639 = vmatpush2.msra.mxu0 0.0
    %640 = vmatprep.subr.mxu0 0.0
    %641 = vmatpush2.msra.mxu0 0.0
    %642 = vmatprep.subr.mxu0 0.0
    %643 = vmatpush2.msra.mxu0 0.0
    %644 = vmatprep.subr.mxu0 0.0
    %645 = vmatpush2.msra.mxu0 0.0
    %646 = vmatprep.subr.mxu0 0.0
    %647 = vmatpush2.msra.mxu0 0.0
    %648 = vmatprep.mubr.f32.mxu0 0.0
    %649 = vmatmul.mubr.f32.gmra.mxu0 %v582
    %v650 = vpop.f32.mrf.mxu0
    %v651 = vadd.f32 0.0, %v650
    %v652 = vpop.f32.mrf.mxu0
    %653 = vdwg.mxu0
    %v654 = vadd.f32 %v138, %v651
    %v655 = vxor.u32 %v654, 2147483648
    %v656 = vmul.f32 %v655, 1.442695
    %v657 = vpow.pop %v656
    %v658 = vadd.f32 %v657, 1.0
    %v659 = vrcp.pop %v658
    %v660 = vmul.f32 1.0, %v659
    %v661 = vtanh.pop %v654
    %v663 = vrot.slane %v566, 6
    %v665 = vmul.f32 %v660, %v663
    %667 = vrot.lane.b32.xlu0 %v661, 32
    %v668 = vpop.permute.xlu0 %667
    %v670 = vmul.f32 %v660, %v668
    %672 = vrot.lane.b32.xlu0 %v670, 32
    %v673 = vpop.permute.xlu0 %672
    %v675 = vadd.f32 %v665, %v673
    %v676 = vtanh.pop %v675
    %678 = vrot.lane.b32.xlu0 %v676, 32
    %v679 = vpop.permute.xlu0 %678
    %v681 = vmul.f32 %v660, %v679
    %683 = vrot.lane.b32.xlu0 %v681, 64
    %v684 = vpop.permute.xlu0 %683
    %686 = vst.msk [vmem:[#allocation2 + $0x8] sm:$0x3] %vm244, %v684
    %v687 = vsel %vm141, %v684, 0
    %689 = vmatprep.subr.mxu0 0.0
    %690 = vmatpush1.msra.mxu0 0.0
    %691 = vmatprep.subr.mxu0 0.0
    %692 = vmatpush1.msra.mxu0 0.0
    %693 = vmatprep.subr.mxu0 0.0
    %694 = vmatpush1.msra.mxu0 0.0
    %695 = vmatprep.subr.mxu0 0.0
    %696 = vmatpush1.msra.mxu0 0.0
    %697 = vmatprep.subr.mxu0 0.0
    %698 = vmatpush1.msra.mxu0 0.0
    %699 = vmatprep.subr.mxu0 0.0
    %700 = vmatpush1.msra.mxu0 0.0
    %701 = vmatprep.subr.mxu0 0.0
    %702 = vmatpush1.msra.mxu0 0.0
    %703 = vmatprep.subr.mxu0 0.0
    %704 = vmatpush1.msra.mxu0 0.0
    %705 = vmatprep.subr.mxu0 0.0
    %706 = vmatpush1.msra.mxu0 0.0
    %707 = vmatprep.subr.mxu0 0.0
    %708 = vmatpush1.msra.mxu0 0.0
    %709 = vmatprep.subr.mxu0 0.0
    %710 = vmatpush1.msra.mxu0 0.0
    %711 = vmatprep.subr.mxu0 0.0
    %712 = vmatpush1.msra.mxu0 0.0
    %713 = vmatprep.subr.mxu0 0.0
    %714 = vmatpush1.msra.mxu0 %v47
    %715 = vmatprep.subr.mxu0 0.0
    %716 = vmatpush1.msra.mxu0 %v46
    %717 = vmatprep.subr.mxu0 0.0
    %718 = vmatpush1.msra.mxu0 %v45
    %719 = vmatprep.subr.mxu0 0.0
    %720 = vmatpush1.msra.mxu0 %v44
    %721 = vmatprep.subr.mxu0 0.0
    %722 = vmatpush2.msra.mxu0 0.0
    %723 = vmatprep.subr.mxu0 0.0
    %724 = vmatpush2.msra.mxu0 0.0
    %725 = vmatprep.subr.mxu0 0.0
    %726 = vmatpush2.msra.mxu0 0.0
    %727 = vmatprep.subr.mxu0 0.0
    %728 = vmatpush2.msra.mxu0 0.0
    %729 = vmatprep.subr.mxu0 0.0
    %730 = vmatpush2.msra.mxu0 0.0
    %731 = vmatprep.subr.mxu0 0.0
    %732 = vmatpush2.msra.mxu0 0.0
    %733 = vmatprep.subr.mxu0 0.0
    %734 = vmatpush2.msra.mxu0 0.0
    %735 = vmatprep.subr.mxu0 0.0
    %736 = vmatpush2.msra.mxu0 0.0
    %737 = vmatprep.subr.mxu0 0.0
    %738 = vmatpush2.msra.mxu0 0.0
    %739 = vmatprep.subr.mxu0 0.0
    %740 = vmatpush2.msra.mxu0 0.0
    %741 = vmatprep.subr.mxu0 0.0
    %742 = vmatpush2.msra.mxu0 0.0
    %743 = vmatprep.subr.mxu0 0.0
    %744 = vmatpush2.msra.mxu0 0.0
    %745 = vmatprep.subr.mxu0 0.0
    %746 = vmatpush2.msra.mxu0 0.0
    %747 = vmatprep.subr.mxu0 0.0
    %748 = vmatpush2.msra.mxu0 0.0
    %749 = vmatprep.subr.mxu0 0.0
    %750 = vmatpush2.msra.mxu0 0.0
    %751 = vmatprep.subr.mxu0 0.0
    %752 = vmatpush2.msra.mxu0 0.0
    %753 = vmatprep.mubr.f32.mxu0 0.0
    %754 = vmatmul.mubr.f32.gmra.mxu0 %v687
    %v755 = vpop.f32.mrf.mxu0
    %v756 = vadd.f32 0.0, %v755
    %v757 = vpop.f32.mrf.mxu0
    %758 = vdwg.mxu0
    %v760 = vrot.slane %v756, 6
    %v762 = vadd.f32 %v138, %v760
    %v763 = vxor.u32 %v762, 2147483648
    %v764 = vmul.f32 %v763, 1.442695
    %v765 = vpow.pop %v764
    %v766 = vadd.f32 %v765, 1.0
    %v767 = vrcp.pop %v766
    %v768 = vmul.f32 1.0, %v767
    %v769 = vtanh.pop %v762
    %v771 = vrot.slane %v675, 6
    %v773 = vmul.f32 %v768, %v771
    %775 = vrot.lane.b32.xlu0 %v769, 32
    %v776 = vpop.permute.xlu0 %775
    %v778 = vmul.f32 %v768, %v776
    %780 = vrot.lane.b32.xlu0 %v778, 32
    %v781 = vpop.permute.xlu0 %780
    %v783 = vadd.f32 %v773, %v781
    %v784 = vtanh.pop %v783
    %786 = vrot.lane.b32.xlu0 %v784, 32
    %v787 = vpop.permute.xlu0 %786
    %v789 = vmul.f32 %v768, %v787
    %791 = vrot.lane.b32.xlu0 %v789, 64
    %v792 = vpop.permute.xlu0 %791
    %794 = vst.msk [vmem:[#allocation2 + $0x8] sm:$0xc] %vm353, %v792
    %v795 = vrot.slane %v789, 2
    %796 = vrot.lane.b32.xlu0 %v795, 64
    %v797 = vpop.permute.xlu0 %796
    %v798 = vsel %vm141, %v797, 0
    %800 = vmatprep.subr.mxu0 0.0
    %801 = vmatpush1.msra.mxu0 0.0
    %802 = vmatprep.subr.mxu0 0.0
    %803 = vmatpush1.msra.mxu0 0.0
    %804 = vmatprep.subr.mxu0 0.0
    %805 = vmatpush1.msra.mxu0 0.0
    %806 = vmatprep.subr.mxu0 0.0
    %807 = vmatpush1.msra.mxu0 0.0
    %808 = vmatprep.subr.mxu0 0.0
    %809 = vmatpush1.msra.mxu0 0.0
    %810 = vmatprep.subr.mxu0 0.0
    %811 = vmatpush1.msra.mxu0 0.0
    %812 = vmatprep.subr.mxu0 0.0
    %813 = vmatpush1.msra.mxu0 0.0
    %814 = vmatprep.subr.mxu0 0.0
    %815 = vmatpush1.msra.mxu0 0.0
    %816 = vmatprep.subr.mxu0 0.0
    %817 = vmatpush1.msra.mxu0 0.0
    %818 = vmatprep.subr.mxu0 0.0
    %819 = vmatpush1.msra.mxu0 0.0
    %820 = vmatprep.subr.mxu0 0.0
    %821 = vmatpush1.msra.mxu0 0.0
    %822 = vmatprep.subr.mxu0 0.0
    %823 = vmatpush1.msra.mxu0 0.0
    %824 = vmatprep.subr.mxu0 0.0
    %825 = vmatpush1.msra.mxu0 %v47
    %826 = vmatprep.subr.mxu0 0.0
    %827 = vmatpush1.msra.mxu0 %v46
    %828 = vmatprep.subr.mxu0 0.0
    %829 = vmatpush1.msra.mxu0 %v45
    %830 = vmatprep.subr.mxu0 0.0
    %831 = vmatpush1.msra.mxu0 %v44
    %832 = vmatprep.subr.mxu0 0.0
    %833 = vmatpush2.msra.mxu0 0.0
    %834 = vmatprep.subr.mxu0 0.0
    %835 = vmatpush2.msra.mxu0 0.0
    %836 = vmatprep.subr.mxu0 0.0
    %837 = vmatpush2.msra.mxu0 0.0
    %838 = vmatprep.subr.mxu0 0.0
    %839 = vmatpush2.msra.mxu0 0.0
    %840 = vmatprep.subr.mxu0 0.0
    %841 = vmatpush2.msra.mxu0 0.0
    %842 = vmatprep.subr.mxu0 0.0
    %843 = vmatpush2.msra.mxu0 0.0
    %844 = vmatprep.subr.mxu0 0.0
    %845 = vmatpush2.msra.mxu0 0.0
    %846 = vmatprep.subr.mxu0 0.0
    %847 = vmatpush2.msra.mxu0 0.0
    %848 = vmatprep.subr.mxu0 0.0
    %849 = vmatpush2.msra.mxu0 0.0
    %850 = vmatprep.subr.mxu0 0.0
    %851 = vmatpush2.msra.mxu0 0.0
    %852 = vmatprep.subr.mxu0 0.0
    %853 = vmatpush2.msra.mxu0 0.0
    %854 = vmatprep.subr.mxu0 0.0
    %855 = vmatpush2.msra.mxu0 0.0
    %856 = vmatprep.subr.mxu0 0.0
    %857 = vmatpush2.msra.mxu0 0.0
    %858 = vmatprep.subr.mxu0 0.0
    %859 = vmatpush2.msra.mxu0 0.0
    %860 = vmatprep.subr.mxu0 0.0
    %861 = vmatpush2.msra.mxu0 0.0
    %862 = vmatprep.subr.mxu0 0.0
    %863 = vmatpush2.msra.mxu0 0.0
    %864 = vmatprep.mubr.f32.mxu0 0.0
    %865 = vmatmul.mubr.f32.gmra.mxu0 %v798
    %v866 = vpop.f32.mrf.mxu0
    %v867 = vadd.f32 0.0, %v866
    %v868 = vpop.f32.mrf.mxu0
    %869 = vdwg.mxu0
    %v871 = vrot.slane %v867, 4
    %v873 = vadd.f32 %v138, %v871
    %v874 = vxor.u32 %v873, 2147483648
    %v875 = vmul.f32 %v874, 1.442695
    %v876 = vpow.pop %v875
    %v877 = vadd.f32 %v876, 1.0
    %v878 = vrcp.pop %v877
    %v879 = vmul.f32 1.0, %v878
    %v880 = vtanh.pop %v873
    %v882 = vrot.slane %v783, 6
    %v884 = vmul.f32 %v879, %v882
    %886 = vrot.lane.b32.xlu0 %v880, 32
    %v887 = vpop.permute.xlu0 %886
    %v889 = vmul.f32 %v879, %v887
    %891 = vrot.lane.b32.xlu0 %v889, 32
    %v892 = vpop.permute.xlu0 %891
    %v894 = vadd.f32 %v884, %v892
    %v895 = vtanh.pop %v894
    %897 = vrot.lane.b32.xlu0 %v895, 32
    %v898 = vpop.permute.xlu0 %897
    %v900 = vmul.f32 %v879, %v898
    %902 = vrot.lane.b32.xlu0 %v900, 64
    %v903 = vpop.permute.xlu0 %902
    %905 = vst.msk [vmem:[#allocation2 + $0x8] sm:$0x30] %vm465, %v903
    %v906 = vrot.slane %v900, 4
    %907 = vrot.lane.b32.xlu0 %v906, 64
    %v908 = vpop.permute.xlu0 %907
    %v909 = vsel %vm141, %v908, 0
    %911 = vmatprep.subr.mxu0 0.0
    %912 = vmatpush1.msra.mxu0 0.0
    %913 = vmatprep.subr.mxu0 0.0
    %914 = vmatpush1.msra.mxu0 0.0
    %915 = vmatprep.subr.mxu0 0.0
    %916 = vmatpush1.msra.mxu0 0.0
    %917 = vmatprep.subr.mxu0 0.0
    %918 = vmatpush1.msra.mxu0 0.0
    %919 = vmatprep.subr.mxu0 0.0
    %920 = vmatpush1.msra.mxu0 0.0
    %921 = vmatprep.subr.mxu0 0.0
    %922 = vmatpush1.msra.mxu0 0.0
    %923 = vmatprep.subr.mxu0 0.0
    %924 = vmatpush1.msra.mxu0 0.0
    %925 = vmatprep.subr.mxu0 0.0
    %926 = vmatpush1.msra.mxu0 0.0
    %927 = vmatprep.subr.mxu0 0.0
    %928 = vmatpush1.msra.mxu0 0.0
    %929 = vmatprep.subr.mxu0 0.0
    %930 = vmatpush1.msra.mxu0 0.0
    %931 = vmatprep.subr.mxu0 0.0
    %932 = vmatpush1.msra.mxu0 0.0
    %933 = vmatprep.subr.mxu0 0.0
    %934 = vmatpush1.msra.mxu0 0.0
    %935 = vmatprep.subr.mxu0 0.0
    %936 = vmatpush1.msra.mxu0 %v47
    %937 = vmatprep.subr.mxu0 0.0
    %938 = vmatpush1.msra.mxu0 %v46
    %939 = vmatprep.subr.mxu0 0.0
    %940 = vmatpush1.msra.mxu0 %v45
    %941 = vmatprep.subr.mxu0 0.0
    %942 = vmatpush1.msra.mxu0 %v44
    %943 = vmatprep.subr.mxu0 0.0
    %944 = vmatpush2.msra.mxu0 0.0
    %945 = vmatprep.subr.mxu0 0.0
    %946 = vmatpush2.msra.mxu0 0.0
    %947 = vmatprep.subr.mxu0 0.0
    %948 = vmatpush2.msra.mxu0 0.0
    %949 = vmatprep.subr.mxu0 0.0
    %950 = vmatpush2.msra.mxu0 0.0
    %951 = vmatprep.subr.mxu0 0.0
    %952 = vmatpush2.msra.mxu0 0.0
    %953 = vmatprep.subr.mxu0 0.0
    %954 = vmatpush2.msra.mxu0 0.0
    %955 = vmatprep.subr.mxu0 0.0
    %956 = vmatpush2.msra.mxu0 0.0
    %957 = vmatprep.subr.mxu0 0.0
    %958 = vmatpush2.msra.mxu0 0.0
    %959 = vmatprep.subr.mxu0 0.0
    %960 = vmatpush2.msra.mxu0 0.0
    %961 = vmatprep.subr.mxu0 0.0
    %962 = vmatpush2.msra.mxu0 0.0
    %963 = vmatprep.subr.mxu0 0.0
    %964 = vmatpush2.msra.mxu0 0.0
    %965 = vmatprep.subr.mxu0 0.0
    %966 = vmatpush2.msra.mxu0 0.0
    %967 = vmatprep.subr.mxu0 0.0
    %968 = vmatpush2.msra.mxu0 0.0
    %969 = vmatprep.subr.mxu0 0.0
    %970 = vmatpush2.msra.mxu0 0.0
    %971 = vmatprep.subr.mxu0 0.0
    %972 = vmatpush2.msra.mxu0 0.0
    %973 = vmatprep.subr.mxu0 0.0
    %974 = vmatpush2.msra.mxu0 0.0
    %975 = vmatprep.mubr.f32.mxu0 0.0
    %976 = vmatmul.mubr.f32.gmra.mxu0 %v909
    %v977 = vpop.f32.mrf.mxu0
    %v978 = vadd.f32 0.0, %v977
    %v979 = vpop.f32.mrf.mxu0
    %980 = vdwg.mxu0
    %v982 = vrot.slane %v978, 2
    %v984 = vadd.f32 %v138, %v982
    %v985 = vxor.u32 %v984, 2147483648
    %v986 = vmul.f32 %v985, 1.442695
    %v987 = vpow.pop %v986
    %v988 = vadd.f32 %v987, 1.0
    %v989 = vrcp.pop %v988
    %v990 = vmul.f32 1.0, %v989
    %v991 = vtanh.pop %v984
    %v993 = vrot.slane %v894, 6
    %v995 = vmul.f32 %v990, %v993
    %997 = vrot.lane.b32.xlu0 %v991, 32
    %v998 = vpop.permute.xlu0 %997
    %v1000 = vmul.f32 %v990, %v998
    %1002 = vrot.lane.b32.xlu0 %v1000, 32
    %v1003 = vpop.permute.xlu0 %1002
    %v1005 = vadd.f32 %v995, %v1003
    %v1006 = vtanh.pop %v1005
    %1008 = vrot.lane.b32.xlu0 %v1006, 32
    %v1009 = vpop.permute.xlu0 %1008
    %v1011 = vmul.f32 %v990, %v1009
    %1013 = vrot.lane.b32.xlu0 %v1011, 64
    %v1014 = vpop.permute.xlu0 %1013
    %1016 = vst.msk [vmem:[#allocation2 + $0x8] sm:$0xc0] %vm577, %v1014
    %v1017 = vld [vmem:[#allocation2] sm:$0xff]
    %v1018 = vld [vmem:[#allocation2 + $0x8] sm:$0xff]
    %v1019 = vld [vmem:[%s4] sm:$0xff]
    %v1020 = vld [vmem:[%s4 + $0x8] sm:$0xff]
    %v1021 = vld [vmem:[%s4 + $0x10] sm:$0xff]
    %v1022 = vld [vmem:[%s4 + $0x18] sm:$0xff]
    %v1023 = vld [vmem:[%s5] sm:$0xff]
    %v1024 = vld [vmem:[%s5 + $0x8] sm:$0xff]
    %v1025 = vld [vmem:[%s5 + $0x10] sm:$0xff]
    %v1026 = vld [vmem:[%s5 + $0x18] sm:$0xff]
    %v1027 = vld [vmem:[%s6] sm:$0x1]
    %v1029 = vlaneseq
    %v1030 = vshrl.u32 %v1029, 7
    %v1031 = vsub.s32 0, %v1030
    %v1032 = vrot.slane %v1027, %v1031
    %v1035 = vsel %vm141, %v1017, 0
    %v1038 = vsel %vm141, %v1018, 0
    %1040 = vmatprep.subr.mxu0 0.0
    %1041 = vmatpush1.msra.mxu0 0.0
    %1042 = vmatprep.subr.mxu0 0.0
    %1043 = vmatpush1.msra.mxu0 0.0
    %1044 = vmatprep.subr.mxu0 0.0
    %1045 = vmatpush1.msra.mxu0 0.0
    %1046 = vmatprep.subr.mxu0 0.0
    %1047 = vmatpush1.msra.mxu0 0.0
    %1048 = vmatprep.subr.mxu0 0.0
    %1049 = vmatpush1.msra.mxu0 0.0
    %1050 = vmatprep.subr.mxu0 0.0
    %1051 = vmatpush1.msra.mxu0 0.0
    %1052 = vmatprep.subr.mxu0 0.0
    %1053 = vmatpush1.msra.mxu0 0.0
    %1054 = vmatprep.subr.mxu0 0.0
    %1055 = vmatpush1.msra.mxu0 0.0
    %1056 = vmatprep.subr.mxu0 0.0
    %1057 = vmatpush1.msra.mxu0 0.0
    %1058 = vmatprep.subr.mxu0 0.0
    %1059 = vmatpush1.msra.mxu0 0.0
    %1060 = vmatprep.subr.mxu0 0.0
    %1061 = vmatpush1.msra.mxu0 0.0
    %1062 = vmatprep.subr.mxu0 0.0
    %1063 = vmatpush1.msra.mxu0 0.0
    %1064 = vmatprep.subr.mxu0 0.0
    %1065 = vmatpush1.msra.mxu0 %v1022
    %1066 = vmatprep.subr.mxu0 0.0
    %1067 = vmatpush1.msra.mxu0 %v1021
    %1068 = vmatprep.subr.mxu0 0.0
    %1069 = vmatpush1.msra.mxu0 %v1020
    %1070 = vmatprep.subr.mxu0 0.0
    %1071 = vmatpush1.msra.mxu0 %v1019
    %1072 = vmatprep.subr.mxu0 0.0
    %1073 = vmatpush2.msra.mxu0 0.0
    %1074 = vmatprep.subr.mxu0 0.0
    %1075 = vmatpush2.msra.mxu0 0.0
    %1076 = vmatprep.subr.mxu0 0.0
    %1077 = vmatpush2.msra.mxu0 0.0
    %1078 = vmatprep.subr.mxu0 0.0
    %1079 = vmatpush2.msra.mxu0 0.0
    %1080 = vmatprep.subr.mxu0 0.0
    %1081 = vmatpush2.msra.mxu0 0.0
    %1082 = vmatprep.subr.mxu0 0.0
    %1083 = vmatpush2.msra.mxu0 0.0
    %1084 = vmatprep.subr.mxu0 0.0
    %1085 = vmatpush2.msra.mxu0 0.0
    %1086 = vmatprep.subr.mxu0 0.0
    %1087 = vmatpush2.msra.mxu0 0.0
    %1088 = vmatprep.subr.mxu0 0.0
    %1089 = vmatpush2.msra.mxu0 0.0
    %1090 = vmatprep.subr.mxu0 0.0
    %1091 = vmatpush2.msra.mxu0 0.0
    %1092 = vmatprep.subr.mxu0 0.0
    %1093 = vmatpush2.msra.mxu0 0.0
    %1094 = vmatprep.subr.mxu0 0.0
    %1095 = vmatpush2.msra.mxu0 0.0
    %1096 = vmatprep.subr.mxu0 0.0
    %1097 = vmatpush2.msra.mxu0 0.0
    %1098 = vmatprep.subr.mxu0 0.0
    %1099 = vmatpush2.msra.mxu0 0.0
    %1100 = vmatprep.subr.mxu0 0.0
    %1101 = vmatpush2.msra.mxu0 0.0
    %1102 = vmatprep.subr.mxu0 0.0
    %1103 = vmatpush2.msra.mxu0 0.0
    %1104 = vmatprep.mubr.f32.mxu0 0.0
    %1105 = vmatmul.mubr.f32.gmra.mxu0 %v1035
    %v1106 = vpop.f32.mrf.mxu0
    %v1107 = vadd.f32 %v1032, %v1106
    %v1108 = vpop.f32.mrf.mxu0
    %1109 = vmatprep.mubr.f32.mxu0 0.0
    %1110 = vmatmul.mubr.f32.gmra.mxu0 %v1038
    %v1111 = vpop.f32.mrf.mxu0
    %v1112 = vadd.f32 %v1032, %v1111
    %v1113 = vpop.f32.mrf.mxu0
    %1114 = vdwg.mxu0
    %1115 = vmatprep.subr.mxu0 0.0
    %1116 = vmatpush1.msra.mxu0 0.0
    %1117 = vmatprep.subr.mxu0 0.0
    %1118 = vmatpush1.msra.mxu0 0.0
    %1119 = vmatprep.subr.mxu0 0.0
    %1120 = vmatpush1.msra.mxu0 0.0
    %1121 = vmatprep.subr.mxu0 0.0
    %1122 = vmatpush1.msra.mxu0 0.0
    %1123 = vmatprep.subr.mxu0 0.0
    %1124 = vmatpush1.msra.mxu0 0.0
    %1125 = vmatprep.subr.mxu0 0.0
    %1126 = vmatpush1.msra.mxu0 0.0
    %1127 = vmatprep.subr.mxu0 0.0
    %1128 = vmatpush1.msra.mxu0 0.0
    %1129 = vmatprep.subr.mxu0 0.0
    %1130 = vmatpush1.msra.mxu0 0.0
    %1131 = vmatprep.subr.mxu0 0.0
    %1132 = vmatpush1.msra.mxu0 0.0
    %1133 = vmatprep.subr.mxu0 0.0
    %1134 = vmatpush1.msra.mxu0 0.0
    %1135 = vmatprep.subr.mxu0 0.0
    %1136 = vmatpush1.msra.mxu0 0.0
    %1137 = vmatprep.subr.mxu0 0.0
    %1138 = vmatpush1.msra.mxu0 0.0
    %1139 = vmatprep.subr.mxu0 0.0
    %1140 = vmatpush1.msra.mxu0 %v1026
    %1141 = vmatprep.subr.mxu0 0.0
    %1142 = vmatpush1.msra.mxu0 %v1025
    %1143 = vmatprep.subr.mxu0 0.0
    %1144 = vmatpush1.msra.mxu0 %v1024
    %1145 = vmatprep.subr.mxu0 0.0
    %1146 = vmatpush1.msra.mxu0 %v1023
    %1147 = vmatprep.subr.mxu0 0.0
    %1148 = vmatpush2.msra.mxu0 0.0
    %1149 = vmatprep.subr.mxu0 0.0
    %1150 = vmatpush2.msra.mxu0 0.0
    %1151 = vmatprep.subr.mxu0 0.0
    %1152 = vmatpush2.msra.mxu0 0.0
    %1153 = vmatprep.subr.mxu0 0.0
    %1154 = vmatpush2.msra.mxu0 0.0
    %1155 = vmatprep.subr.mxu0 0.0
    %1156 = vmatpush2.msra.mxu0 0.0
    %1157 = vmatprep.subr.mxu0 0.0
    %1158 = vmatpush2.msra.mxu0 0.0
    %1159 = vmatprep.subr.mxu0 0.0
    %1160 = vmatpush2.msra.mxu0 0.0
    %1161 = vmatprep.subr.mxu0 0.0
    %1162 = vmatpush2.msra.mxu0 0.0
    %1163 = vmatprep.subr.mxu0 0.0
    %1164 = vmatpush2.msra.mxu0 0.0
    %1165 = vmatprep.subr.mxu0 0.0
    %1166 = vmatpush2.msra.mxu0 0.0
    %1167 = vmatprep.subr.mxu0 0.0
    %1168 = vmatpush2.msra.mxu0 0.0
    %1169 = vmatprep.subr.mxu0 0.0
    %1170 = vmatpush2.msra.mxu0 0.0
    %1171 = vmatprep.subr.mxu0 0.0
    %1172 = vmatpush2.msra.mxu0 0.0
    %1173 = vmatprep.subr.mxu0 0.0
    %1174 = vmatpush2.msra.mxu0 0.0
    %1175 = vmatprep.subr.mxu0 0.0
    %1176 = vmatpush2.msra.mxu0 0.0
    %1177 = vmatprep.subr.mxu0 0.0
    %1178 = vmatpush2.msra.mxu0 0.0
    %1179 = vmatprep.mubr.f32.mxu0 0.0
    %1180 = vmatmul.mubr.f32.gmra.mxu0 %v143
    %v1181 = vpop.f32.mrf.mxu0
    %v1182 = vadd.f32 0.0, %v1181
    %v1183 = vpop.f32.mrf.mxu0
    %1184 = vdwg.mxu0
    %v1185 = vadd.f32 %v1107, %v1182
    %v1186 = vxor.u32 %v1185, 2147483648
    %v1187 = vmul.f32 %v1186, 1.442695
    %v1188 = vpow.pop %v1187
    %v1189 = vadd.f32 %v1188, 1.0
    %v1190 = vrcp.pop %v1189
    %v1191 = vmul.f32 1.0, %v1190
    %v1192 = vtanh.pop %v1185
    %v1193 = vmul.f32 %v1191, 0.0
    %1195 = vrot.lane.b32.xlu0 %v1192, 32
    %v1196 = vpop.permute.xlu0 %1195
    %v1198 = vmul.f32 %v1191, %v1196
    %1200 = vrot.lane.b32.xlu0 %v1198, 32
    %v1201 = vpop.permute.xlu0 %1200
    %v1203 = vadd.f32 %v1193, %v1201
    %v1204 = vtanh.pop %v1203
    %1206 = vrot.lane.b32.xlu0 %v1204, 32
    %v1207 = vpop.permute.xlu0 %1206
    %v1209 = vmul.f32 %v1191, %v1207
    %1211 = vrot.lane.b32.xlu0 %v1209, 64
    %v1212 = vpop.permute.xlu0 %1211
    %v1213 = vsel %vm141, %v1212, 0
    %1215 = vmatprep.subr.mxu0 0.0
    %1216 = vmatpush1.msra.mxu0 0.0
    %1217 = vmatprep.subr.mxu0 0.0
    %1218 = vmatpush1.msra.mxu0 0.0
    %1219 = vmatprep.subr.mxu0 0.0
    %1220 = vmatpush1.msra.mxu0 0.0
    %1221 = vmatprep.subr.mxu0 0.0
    %1222 = vmatpush1.msra.mxu0 0.0
    %1223 = vmatprep.subr.mxu0 0.0
    %1224 = vmatpush1.msra.mxu0 0.0
    %1225 = vmatprep.subr.mxu0 0.0
    %1226 = vmatpush1.msra.mxu0 0.0
    %1227 = vmatprep.subr.mxu0 0.0
    %1228 = vmatpush1.msra.mxu0 0.0
    %1229 = vmatprep.subr.mxu0 0.0
    %1230 = vmatpush1.msra.mxu0 0.0
    %1231 = vmatprep.subr.mxu0 0.0
    %1232 = vmatpush1.msra.mxu0 0.0
    %1233 = vmatprep.subr.mxu0 0.0
    %1234 = vmatpush1.msra.mxu0 0.0
    %1235 = vmatprep.subr.mxu0 0.0
    %1236 = vmatpush1.msra.mxu0 0.0
    %1237 = vmatprep.subr.mxu0 0.0
    %1238 = vmatpush1.msra.mxu0 0.0
    %1239 = vmatprep.subr.mxu0 0.0
    %1240 = vmatpush1.msra.mxu0 %v1026
    %1241 = vmatprep.subr.mxu0 0.0
    %1242 = vmatpush1.msra.mxu0 %v1025
    %1243 = vmatprep.subr.mxu0 0.0
    %1244 = vmatpush1.msra.mxu0 %v1024
    %1245 = vmatprep.subr.mxu0 0.0
    %1246 = vmatpush1.msra.mxu0 %v1023
    %1247 = vmatprep.subr.mxu0 0.0
    %1248 = vmatpush2.msra.mxu0 0.0
    %1249 = vmatprep.subr.mxu0 0.0
    %1250 = vmatpush2.msra.mxu0 0.0
    %1251 = vmatprep.subr.mxu0 0.0
    %1252 = vmatpush2.msra.mxu0 0.0
    %1253 = vmatprep.subr.mxu0 0.0
    %1254 = vmatpush2.msra.mxu0 0.0
    %1255 = vmatprep.subr.mxu0 0.0
    %1256 = vmatpush2.msra.mxu0 0.0
    %1257 = vmatprep.subr.mxu0 0.0
    %1258 = vmatpush2.msra.mxu0 0.0
    %1259 = vmatprep.subr.mxu0 0.0
    %1260 = vmatpush2.msra.mxu0 0.0
    %1261 = vmatprep.subr.mxu0 0.0
    %1262 = vmatpush2.msra.mxu0 0.0
    %1263 = vmatprep.subr.mxu0 0.0
    %1264 = vmatpush2.msra.mxu0 0.0
    %1265 = vmatprep.subr.mxu0 0.0
    %1266 = vmatpush2.msra.mxu0 0.0
    %1267 = vmatprep.subr.mxu0 0.0
    %1268 = vmatpush2.msra.mxu0 0.0
    %1269 = vmatprep.subr.mxu0 0.0
    %1270 = vmatpush2.msra.mxu0 0.0
    %1271 = vmatprep.subr.mxu0 0.0
    %1272 = vmatpush2.msra.mxu0 0.0
    %1273 = vmatprep.subr.mxu0 0.0
    %1274 = vmatpush2.msra.mxu0 0.0
    %1275 = vmatprep.subr.mxu0 0.0
    %1276 = vmatpush2.msra.mxu0 0.0
    %1277 = vmatprep.subr.mxu0 0.0
    %1278 = vmatpush2.msra.mxu0 0.0
    %1279 = vmatprep.mubr.f32.mxu0 0.0
    %1280 = vmatmul.mubr.f32.gmra.mxu0 %v1213
    %v1281 = vpop.f32.mrf.mxu0
    %v1282 = vadd.f32 0.0, %v1281
    %v1283 = vpop.f32.mrf.mxu0
    %1284 = vdwg.mxu0
    %v1286 = vrot.slane %v1282, 6
    %v1288 = vadd.f32 %v1107, %v1286
    %v1289 = vxor.u32 %v1288, 2147483648
    %v1290 = vmul.f32 %v1289, 1.442695
    %v1291 = vpow.pop %v1290
    %v1292 = vadd.f32 %v1291, 1.0
    %v1293 = vrcp.pop %v1292
    %v1294 = vmul.f32 1.0, %v1293
    %v1295 = vtanh.pop %v1288
    %v1297 = vrot.slane %v1203, 6
    %v1299 = vmul.f32 %v1294, %v1297
    %1301 = vrot.lane.b32.xlu0 %v1295, 32
    %v1302 = vpop.permute.xlu0 %1301
    %v1304 = vmul.f32 %v1294, %v1302
    %1306 = vrot.lane.b32.xlu0 %v1304, 32
    %v1307 = vpop.permute.xlu0 %1306
    %v1309 = vadd.f32 %v1299, %v1307
    %v1310 = vtanh.pop %v1309
    %1312 = vrot.lane.b32.xlu0 %v1310, 32
    %v1313 = vpop.permute.xlu0 %1312
    %v1315 = vmul.f32 %v1294, %v1313
    %v1317 = vrot.slane %v1315, 2
    %1318 = vrot.lane.b32.xlu0 %v1317, 64
    %v1319 = vpop.permute.xlu0 %1318
    %v1320 = vsel %vm141, %v1319, 0
    %1322 = vmatprep.subr.mxu0 0.0
    %1323 = vmatpush1.msra.mxu0 0.0
    %1324 = vmatprep.subr.mxu0 0.0
    %1325 = vmatpush1.msra.mxu0 0.0
    %1326 = vmatprep.subr.mxu0 0.0
    %1327 = vmatpush1.msra.mxu0 0.0
    %1328 = vmatprep.subr.mxu0 0.0
    %1329 = vmatpush1.msra.mxu0 0.0
    %1330 = vmatprep.subr.mxu0 0.0
    %1331 = vmatpush1.msra.mxu0 0.0
    %1332 = vmatprep.subr.mxu0 0.0
    %1333 = vmatpush1.msra.mxu0 0.0
    %1334 = vmatprep.subr.mxu0 0.0
    %1335 = vmatpush1.msra.mxu0 0.0
    %1336 = vmatprep.subr.mxu0 0.0
    %1337 = vmatpush1.msra.mxu0 0.0
    %1338 = vmatprep.subr.mxu0 0.0
    %1339 = vmatpush1.msra.mxu0 0.0
    %1340 = vmatprep.subr.mxu0 0.0
    %1341 = vmatpush1.msra.mxu0 0.0
    %1342 = vmatprep.subr.mxu0 0.0
    %1343 = vmatpush1.msra.mxu0 0.0
    %1344 = vmatprep.subr.mxu0 0.0
    %1345 = vmatpush1.msra.mxu0 0.0
    %1346 = vmatprep.subr.mxu0 0.0
    %1347 = vmatpush1.msra.mxu0 %v1026
    %1348 = vmatprep.subr.mxu0 0.0
    %1349 = vmatpush1.msra.mxu0 %v1025
    %1350 = vmatprep.subr.mxu0 0.0
    %1351 = vmatpush1.msra.mxu0 %v1024
    %1352 = vmatprep.subr.mxu0 0.0
    %1353 = vmatpush1.msra.mxu0 %v1023
    %1354 = vmatprep.subr.mxu0 0.0
    %1355 = vmatpush2.msra.mxu0 0.0
    %1356 = vmatprep.subr.mxu0 0.0
    %1357 = vmatpush2.msra.mxu0 0.0
    %1358 = vmatprep.subr.mxu0 0.0
    %1359 = vmatpush2.msra.mxu0 0.0
    %1360 = vmatprep.subr.mxu0 0.0
    %1361 = vmatpush2.msra.mxu0 0.0
    %1362 = vmatprep.subr.mxu0 0.0
    %1363 = vmatpush2.msra.mxu0 0.0
    %1364 = vmatprep.subr.mxu0 0.0
    %1365 = vmatpush2.msra.mxu0 0.0
    %1366 = vmatprep.subr.mxu0 0.0
    %1367 = vmatpush2.msra.mxu0 0.0
    %1368 = vmatprep.subr.mxu0 0.0
    %1369 = vmatpush2.msra.mxu0 0.0
    %1370 = vmatprep.subr.mxu0 0.0
    %1371 = vmatpush2.msra.mxu0 0.0
    %1372 = vmatprep.subr.mxu0 0.0
    %1373 = vmatpush2.msra.mxu0 0.0
    %1374 = vmatprep.subr.mxu0 0.0
    %1375 = vmatpush2.msra.mxu0 0.0
    %1376 = vmatprep.subr.mxu0 0.0
    %1377 = vmatpush2.msra.mxu0 0.0
    %1378 = vmatprep.subr.mxu0 0.0
    %1379 = vmatpush2.msra.mxu0 0.0
    %1380 = vmatprep.subr.mxu0 0.0
    %1381 = vmatpush2.msra.mxu0 0.0
    %1382 = vmatprep.subr.mxu0 0.0
    %1383 = vmatpush2.msra.mxu0 0.0
    %1384 = vmatprep.subr.mxu0 0.0
    %1385 = vmatpush2.msra.mxu0 0.0
    %1386 = vmatprep.mubr.f32.mxu0 0.0
    %1387 = vmatmul.mubr.f32.gmra.mxu0 %v1320
    %v1388 = vpop.f32.mrf.mxu0
    %v1389 = vadd.f32 0.0, %v1388
    %v1390 = vpop.f32.mrf.mxu0
    %1391 = vdwg.mxu0
    %v1393 = vrot.slane %v1389, 4
    %v1395 = vadd.f32 %v1107, %v1393
    %v1396 = vxor.u32 %v1395, 2147483648
    %v1397 = vmul.f32 %v1396, 1.442695
    %v1398 = vpow.pop %v1397
    %v1399 = vadd.f32 %v1398, 1.0
    %v1400 = vrcp.pop %v1399
    %v1401 = vmul.f32 1.0, %v1400
    %v1402 = vtanh.pop %v1395
    %v1404 = vrot.slane %v1309, 6
    %v1406 = vmul.f32 %v1401, %v1404
    %1408 = vrot.lane.b32.xlu0 %v1402, 32
    %v1409 = vpop.permute.xlu0 %1408
    %v1411 = vmul.f32 %v1401, %v1409
    %1413 = vrot.lane.b32.xlu0 %v1411, 32
    %v1414 = vpop.permute.xlu0 %1413
    %v1416 = vadd.f32 %v1406, %v1414
    %v1417 = vtanh.pop %v1416
    %1419 = vrot.lane.b32.xlu0 %v1417, 32
    %v1420 = vpop.permute.xlu0 %1419
    %v1422 = vmul.f32 %v1401, %v1420
    %v1424 = vrot.slane %v1422, 4
    %1425 = vrot.lane.b32.xlu0 %v1424, 64
    %v1426 = vpop.permute.xlu0 %1425
    %v1427 = vsel %vm141, %v1426, 0
    %1429 = vmatprep.subr.mxu0 0.0
    %1430 = vmatpush1.msra.mxu0 0.0
    %1431 = vmatprep.subr.mxu0 0.0
    %1432 = vmatpush1.msra.mxu0 0.0
    %1433 = vmatprep.subr.mxu0 0.0
    %1434 = vmatpush1.msra.mxu0 0.0
    %1435 = vmatprep.subr.mxu0 0.0
    %1436 = vmatpush1.msra.mxu0 0.0
    %1437 = vmatprep.subr.mxu0 0.0
    %1438 = vmatpush1.msra.mxu0 0.0
    %1439 = vmatprep.subr.mxu0 0.0
    %1440 = vmatpush1.msra.mxu0 0.0
    %1441 = vmatprep.subr.mxu0 0.0
    %1442 = vmatpush1.msra.mxu0 0.0
    %1443 = vmatprep.subr.mxu0 0.0
    %1444 = vmatpush1.msra.mxu0 0.0
    %1445 = vmatprep.subr.mxu0 0.0
    %1446 = vmatpush1.msra.mxu0 0.0
    %1447 = vmatprep.subr.mxu0 0.0
    %1448 = vmatpush1.msra.mxu0 0.0
    %1449 = vmatprep.subr.mxu0 0.0
    %1450 = vmatpush1.msra.mxu0 0.0
    %1451 = vmatprep.subr.mxu0 0.0
    %1452 = vmatpush1.msra.mxu0 0.0
    %1453 = vmatprep.subr.mxu0 0.0
    %1454 = vmatpush1.msra.mxu0 %v1026
    %1455 = vmatprep.subr.mxu0 0.0
    %1456 = vmatpush1.msra.mxu0 %v1025
    %1457 = vmatprep.subr.mxu0 0.0
    %1458 = vmatpush1.msra.mxu0 %v1024
    %1459 = vmatprep.subr.mxu0 0.0
    %1460 = vmatpush1.msra.mxu0 %v1023
    %1461 = vmatprep.subr.mxu0 0.0
    %1462 = vmatpush2.msra.mxu0 0.0
    %1463 = vmatprep.subr.mxu0 0.0
    %1464 = vmatpush2.msra.mxu0 0.0
    %1465 = vmatprep.subr.mxu0 0.0
    %1466 = vmatpush2.msra.mxu0 0.0
    %1467 = vmatprep.subr.mxu0 0.0
    %1468 = vmatpush2.msra.mxu0 0.0
    %1469 = vmatprep.subr.mxu0 0.0
    %1470 = vmatpush2.msra.mxu0 0.0
    %1471 = vmatprep.subr.mxu0 0.0
    %1472 = vmatpush2.msra.mxu0 0.0
    %1473 = vmatprep.subr.mxu0 0.0
    %1474 = vmatpush2.msra.mxu0 0.0
    %1475 = vmatprep.subr.mxu0 0.0
    %1476 = vmatpush2.msra.mxu0 0.0
    %1477 = vmatprep.subr.mxu0 0.0
    %1478 = vmatpush2.msra.mxu0 0.0
    %1479 = vmatprep.subr.mxu0 0.0
    %1480 = vmatpush2.msra.mxu0 0.0
    %1481 = vmatprep.subr.mxu0 0.0
    %1482 = vmatpush2.msra.mxu0 0.0
    %1483 = vmatprep.subr.mxu0 0.0
    %1484 = vmatpush2.msra.mxu0 0.0
    %1485 = vmatprep.subr.mxu0 0.0
    %1486 = vmatpush2.msra.mxu0 0.0
    %1487 = vmatprep.subr.mxu0 0.0
    %1488 = vmatpush2.msra.mxu0 0.0
    %1489 = vmatprep.subr.mxu0 0.0
    %1490 = vmatpush2.msra.mxu0 0.0
    %1491 = vmatprep.subr.mxu0 0.0
    %1492 = vmatpush2.msra.mxu0 0.0
    %1493 = vmatprep.mubr.f32.mxu0 0.0
    %1494 = vmatmul.mubr.f32.gmra.mxu0 %v1427
    %v1495 = vpop.f32.mrf.mxu0
    %v1496 = vadd.f32 0.0, %v1495
    %v1497 = vpop.f32.mrf.mxu0
    %1498 = vdwg.mxu0
    %v1500 = vrot.slane %v1496, 2
    %v1502 = vadd.f32 %v1107, %v1500
    %v1503 = vxor.u32 %v1502, 2147483648
    %v1504 = vmul.f32 %v1503, 1.442695
    %v1505 = vpow.pop %v1504
    %v1506 = vadd.f32 %v1505, 1.0
    %v1507 = vrcp.pop %v1506
    %v1508 = vmul.f32 1.0, %v1507
    %v1509 = vtanh.pop %v1502
    %v1511 = vrot.slane %v1416, 6
    %v1513 = vmul.f32 %v1508, %v1511
    %1515 = vrot.lane.b32.xlu0 %v1509, 32
    %v1516 = vpop.permute.xlu0 %1515
    %v1518 = vmul.f32 %v1508, %v1516
    %1520 = vrot.lane.b32.xlu0 %v1518, 32
    %v1521 = vpop.permute.xlu0 %1520
    %v1523 = vadd.f32 %v1513, %v1521
    %v1524 = vtanh.pop %v1523
    %1526 = vrot.lane.b32.xlu0 %v1524, 32
    %v1527 = vpop.permute.xlu0 %1526
    %v1529 = vmul.f32 %v1508, %v1527
    %v1531 = vrot.slane %v1529, 6
    %1532 = vrot.lane.b32.xlu0 %v1531, 64
    %v1533 = vpop.permute.xlu0 %1532
    %v1534 = vsel %vm141, %v1533, 0
    %1536 = vmatprep.subr.mxu0 0.0
    %1537 = vmatpush1.msra.mxu0 0.0
    %1538 = vmatprep.subr.mxu0 0.0
    %1539 = vmatpush1.msra.mxu0 0.0
    %1540 = vmatprep.subr.mxu0 0.0
    %1541 = vmatpush1.msra.mxu0 0.0
    %1542 = vmatprep.subr.mxu0 0.0
    %1543 = vmatpush1.msra.mxu0 0.0
    %1544 = vmatprep.subr.mxu0 0.0
    %1545 = vmatpush1.msra.mxu0 0.0
    %1546 = vmatprep.subr.mxu0 0.0
    %1547 = vmatpush1.msra.mxu0 0.0
    %1548 = vmatprep.subr.mxu0 0.0
    %1549 = vmatpush1.msra.mxu0 0.0
    %1550 = vmatprep.subr.mxu0 0.0
    %1551 = vmatpush1.msra.mxu0 0.0
    %1552 = vmatprep.subr.mxu0 0.0
    %1553 = vmatpush1.msra.mxu0 0.0
    %1554 = vmatprep.subr.mxu0 0.0
    %1555 = vmatpush1.msra.mxu0 0.0
    %1556 = vmatprep.subr.mxu0 0.0
    %1557 = vmatpush1.msra.mxu0 0.0
    %1558 = vmatprep.subr.mxu0 0.0
    %1559 = vmatpush1.msra.mxu0 0.0
    %1560 = vmatprep.subr.mxu0 0.0
    %1561 = vmatpush1.msra.mxu0 %v1026
    %1562 = vmatprep.subr.mxu0 0.0
    %1563 = vmatpush1.msra.mxu0 %v1025
    %1564 = vmatprep.subr.mxu0 0.0
    %1565 = vmatpush1.msra.mxu0 %v1024
    %1566 = vmatprep.subr.mxu0 0.0
    %1567 = vmatpush1.msra.mxu0 %v1023
    %1568 = vmatprep.subr.mxu0 0.0
    %1569 = vmatpush2.msra.mxu0 0.0
    %1570 = vmatprep.subr.mxu0 0.0
    %1571 = vmatpush2.msra.mxu0 0.0
    %1572 = vmatprep.subr.mxu0 0.0
    %1573 = vmatpush2.msra.mxu0 0.0
    %1574 = vmatprep.subr.mxu0 0.0
    %1575 = vmatpush2.msra.mxu0 0.0
    %1576 = vmatprep.subr.mxu0 0.0
    %1577 = vmatpush2.msra.mxu0 0.0
    %1578 = vmatprep.subr.mxu0 0.0
    %1579 = vmatpush2.msra.mxu0 0.0
    %1580 = vmatprep.subr.mxu0 0.0
    %1581 = vmatpush2.msra.mxu0 0.0
    %1582 = vmatprep.subr.mxu0 0.0
    %1583 = vmatpush2.msra.mxu0 0.0
    %1584 = vmatprep.subr.mxu0 0.0
    %1585 = vmatpush2.msra.mxu0 0.0
    %1586 = vmatprep.subr.mxu0 0.0
    %1587 = vmatpush2.msra.mxu0 0.0
    %1588 = vmatprep.subr.mxu0 0.0
    %1589 = vmatpush2.msra.mxu0 0.0
    %1590 = vmatprep.subr.mxu0 0.0
    %1591 = vmatpush2.msra.mxu0 0.0
    %1592 = vmatprep.subr.mxu0 0.0
    %1593 = vmatpush2.msra.mxu0 0.0
    %1594 = vmatprep.subr.mxu0 0.0
    %1595 = vmatpush2.msra.mxu0 0.0
    %1596 = vmatprep.subr.mxu0 0.0
    %1597 = vmatpush2.msra.mxu0 0.0
    %1598 = vmatprep.subr.mxu0 0.0
    %1599 = vmatpush2.msra.mxu0 0.0
    %1600 = vmatprep.mubr.f32.mxu0 0.0
    %1601 = vmatmul.mubr.f32.gmra.mxu0 %v1534
    %v1602 = vpop.f32.mrf.mxu0
    %v1603 = vadd.f32 0.0, %v1602
    %v1604 = vpop.f32.mrf.mxu0
    %1605 = vdwg.mxu0
    %v1606 = vadd.f32 %v1112, %v1603
    %v1607 = vxor.u32 %v1606, 2147483648
    %v1608 = vmul.f32 %v1607, 1.442695
    %v1609 = vpow.pop %v1608
    %v1610 = vadd.f32 %v1609, 1.0
    %v1611 = vrcp.pop %v1610
    %v1612 = vmul.f32 1.0, %v1611
    %v1613 = vtanh.pop %v1606
    %v1615 = vrot.slane %v1523, 6
    %v1617 = vmul.f32 %v1612, %v1615
    %1619 = vrot.lane.b32.xlu0 %v1613, 32
    %v1620 = vpop.permute.xlu0 %1619
    %v1622 = vmul.f32 %v1612, %v1620
    %1624 = vrot.lane.b32.xlu0 %v1622, 32
    %v1625 = vpop.permute.xlu0 %1624
    %v1627 = vadd.f32 %v1617, %v1625
    %v1628 = vtanh.pop %v1627
    %1630 = vrot.lane.b32.xlu0 %v1628, 32
    %v1631 = vpop.permute.xlu0 %1630
    %v1633 = vmul.f32 %v1612, %v1631
    %1635 = vrot.lane.b32.xlu0 %v1633, 64
    %v1636 = vpop.permute.xlu0 %1635
    %v1637 = vsel %vm141, %v1636, 0
    %1639 = vmatprep.subr.mxu0 0.0
    %1640 = vmatpush1.msra.mxu0 0.0
    %1641 = vmatprep.subr.mxu0 0.0
    %1642 = vmatpush1.msra.mxu0 0.0
    %1643 = vmatprep.subr.mxu0 0.0
    %1644 = vmatpush1.msra.mxu0 0.0
    %1645 = vmatprep.subr.mxu0 0.0
    %1646 = vmatpush1.msra.mxu0 0.0
    %1647 = vmatprep.subr.mxu0 0.0
    %1648 = vmatpush1.msra.mxu0 0.0
    %1649 = vmatprep.subr.mxu0 0.0
    %1650 = vmatpush1.msra.mxu0 0.0
    %1651 = vmatprep.subr.mxu0 0.0
    %1652 = vmatpush1.msra.mxu0 0.0
    %1653 = vmatprep.subr.mxu0 0.0
    %1654 = vmatpush1.msra.mxu0 0.0
    %1655 = vmatprep.subr.mxu0 0.0
    %1656 = vmatpush1.msra.mxu0 0.0
    %1657 = vmatprep.subr.mxu0 0.0
    %1658 = vmatpush1.msra.mxu0 0.0
    %1659 = vmatprep.subr.mxu0 0.0
    %1660 = vmatpush1.msra.mxu0 0.0
    %1661 = vmatprep.subr.mxu0 0.0
    %1662 = vmatpush1.msra.mxu0 0.0
    %1663 = vmatprep.subr.mxu0 0.0
    %1664 = vmatpush1.msra.mxu0 %v1026
    %1665 = vmatprep.subr.mxu0 0.0
    %1666 = vmatpush1.msra.mxu0 %v1025
    %1667 = vmatprep.subr.mxu0 0.0
    %1668 = vmatpush1.msra.mxu0 %v1024
    %1669 = vmatprep.subr.mxu0 0.0
    %1670 = vmatpush1.msra.mxu0 %v1023
    %1671 = vmatprep.subr.mxu0 0.0
    %1672 = vmatpush2.msra.mxu0 0.0
    %1673 = vmatprep.subr.mxu0 0.0
    %1674 = vmatpush2.msra.mxu0 0.0
    %1675 = vmatprep.subr.mxu0 0.0
    %1676 = vmatpush2.msra.mxu0 0.0
    %1677 = vmatprep.subr.mxu0 0.0
    %1678 = vmatpush2.msra.mxu0 0.0
    %1679 = vmatprep.subr.mxu0 0.0
    %1680 = vmatpush2.msra.mxu0 0.0
    %1681 = vmatprep.subr.mxu0 0.0
    %1682 = vmatpush2.msra.mxu0 0.0
    %1683 = vmatprep.subr.mxu0 0.0
    %1684 = vmatpush2.msra.mxu0 0.0
    %1685 = vmatprep.subr.mxu0 0.0
    %1686 = vmatpush2.msra.mxu0 0.0
    %1687 = vmatprep.subr.mxu0 0.0
    %1688 = vmatpush2.msra.mxu0 0.0
    %1689 = vmatprep.subr.mxu0 0.0
    %1690 = vmatpush2.msra.mxu0 0.0
    %1691 = vmatprep.subr.mxu0 0.0
    %1692 = vmatpush2.msra.mxu0 0.0
    %1693 = vmatprep.subr.mxu0 0.0
    %1694 = vmatpush2.msra.mxu0 0.0
    %1695 = vmatprep.subr.mxu0 0.0
    %1696 = vmatpush2.msra.mxu0 0.0
    %1697 = vmatprep.subr.mxu0 0.0
    %1698 = vmatpush2.msra.mxu0 0.0
    %1699 = vmatprep.subr.mxu0 0.0
    %1700 = vmatpush2.msra.mxu0 0.0
    %1701 = vmatprep.subr.mxu0 0.0
    %1702 = vmatpush2.msra.mxu0 0.0
    %1703 = vmatprep.mubr.f32.mxu0 0.0
    %1704 = vmatmul.mubr.f32.gmra.mxu0 %v1637
    %v1705 = vpop.f32.mrf.mxu0
    %v1706 = vadd.f32 0.0, %v1705
    %v1707 = vpop.f32.mrf.mxu0
    %1708 = vdwg.mxu0
    %v1710 = vrot.slane %v1706, 6
    %v1712 = vadd.f32 %v1112, %v1710
    %v1713 = vxor.u32 %v1712, 2147483648
    %v1714 = vmul.f32 %v1713, 1.442695
    %v1715 = vpow.pop %v1714
    %v1716 = vadd.f32 %v1715, 1.0
    %v1717 = vrcp.pop %v1716
    %v1718 = vmul.f32 1.0, %v1717
    %v1719 = vtanh.pop %v1712
    %v1721 = vrot.slane %v1627, 6
    %v1723 = vmul.f32 %v1718, %v1721
    %1725 = vrot.lane.b32.xlu0 %v1719, 32
    %v1726 = vpop.permute.xlu0 %1725
    %v1728 = vmul.f32 %v1718, %v1726
    %1730 = vrot.lane.b32.xlu0 %v1728, 32
    %v1731 = vpop.permute.xlu0 %1730
    %v1733 = vadd.f32 %v1723, %v1731
    %v1734 = vtanh.pop %v1733
    %1736 = vrot.lane.b32.xlu0 %v1734, 32
    %v1737 = vpop.permute.xlu0 %1736
    %v1739 = vmul.f32 %v1718, %v1737
    %v1741 = vrot.slane %v1739, 2
    %1742 = vrot.lane.b32.xlu0 %v1741, 64
    %v1743 = vpop.permute.xlu0 %1742
    %v1744 = vsel %vm141, %v1743, 0
    %1746 = vmatprep.subr.mxu0 0.0
    %1747 = vmatpush1.msra.mxu0 0.0
    %1748 = vmatprep.subr.mxu0 0.0
    %1749 = vmatpush1.msra.mxu0 0.0
    %1750 = vmatprep.subr.mxu0 0.0
    %1751 = vmatpush1.msra.mxu0 0.0
    %1752 = vmatprep.subr.mxu0 0.0
    %1753 = vmatpush1.msra.mxu0 0.0
    %1754 = vmatprep.subr.mxu0 0.0
    %1755 = vmatpush1.msra.mxu0 0.0
    %1756 = vmatprep.subr.mxu0 0.0
    %1757 = vmatpush1.msra.mxu0 0.0
    %1758 = vmatprep.subr.mxu0 0.0
    %1759 = vmatpush1.msra.mxu0 0.0
    %1760 = vmatprep.subr.mxu0 0.0
    %1761 = vmatpush1.msra.mxu0 0.0
    %1762 = vmatprep.subr.mxu0 0.0
    %1763 = vmatpush1.msra.mxu0 0.0
    %1764 = vmatprep.subr.mxu0 0.0
    %1765 = vmatpush1.msra.mxu0 0.0
    %1766 = vmatprep.subr.mxu0 0.0
    %1767 = vmatpush1.msra.mxu0 0.0
    %1768 = vmatprep.subr.mxu0 0.0
    %1769 = vmatpush1.msra.mxu0 0.0
    %1770 = vmatprep.subr.mxu0 0.0
    %1771 = vmatpush1.msra.mxu0 %v1026
    %1772 = vmatprep.subr.mxu0 0.0
    %1773 = vmatpush1.msra.mxu0 %v1025
    %1774 = vmatprep.subr.mxu0 0.0
    %1775 = vmatpush1.msra.mxu0 %v1024
    %1776 = vmatprep.subr.mxu0 0.0
    %1777 = vmatpush1.msra.mxu0 %v1023
    %1778 = vmatprep.subr.mxu0 0.0
    %1779 = vmatpush2.msra.mxu0 0.0
    %1780 = vmatprep.subr.mxu0 0.0
    %1781 = vmatpush2.msra.mxu0 0.0
    %1782 = vmatprep.subr.mxu0 0.0
    %1783 = vmatpush2.msra.mxu0 0.0
    %1784 = vmatprep.subr.mxu0 0.0
    %1785 = vmatpush2.msra.mxu0 0.0
    %1786 = vmatprep.subr.mxu0 0.0
    %1787 = vmatpush2.msra.mxu0 0.0
    %1788 = vmatprep.subr.mxu0 0.0
    %1789 = vmatpush2.msra.mxu0 0.0
    %1790 = vmatprep.subr.mxu0 0.0
    %1791 = vmatpush2.msra.mxu0 0.0
    %1792 = vmatprep.subr.mxu0 0.0
    %1793 = vmatpush2.msra.mxu0 0.0
    %1794 = vmatprep.subr.mxu0 0.0
    %1795 = vmatpush2.msra.mxu0 0.0
    %1796 = vmatprep.subr.mxu0 0.0
    %1797 = vmatpush2.msra.mxu0 0.0
    %1798 = vmatprep.subr.mxu0 0.0
    %1799 = vmatpush2.msra.mxu0 0.0
    %1800 = vmatprep.subr.mxu0 0.0
    %1801 = vmatpush2.msra.mxu0 0.0
    %1802 = vmatprep.subr.mxu0 0.0
    %1803 = vmatpush2.msra.mxu0 0.0
    %1804 = vmatprep.subr.mxu0 0.0
    %1805 = vmatpush2.msra.mxu0 0.0
    %1806 = vmatprep.subr.mxu0 0.0
    %1807 = vmatpush2.msra.mxu0 0.0
    %1808 = vmatprep.subr.mxu0 0.0
    %1809 = vmatpush2.msra.mxu0 0.0
    %1810 = vmatprep.mubr.f32.mxu0 0.0
    %1811 = vmatmul.mubr.f32.gmra.mxu0 %v1744
    %v1812 = vpop.f32.mrf.mxu0
    %v1813 = vadd.f32 0.0, %v1812
    %v1814 = vpop.f32.mrf.mxu0
    %1815 = vdwg.mxu0
    %v1817 = vrot.slane %v1813, 4
    %v1819 = vadd.f32 %v1112, %v1817
    %v1820 = vxor.u32 %v1819, 2147483648
    %v1821 = vmul.f32 %v1820, 1.442695
    %v1822 = vpow.pop %v1821
    %v1823 = vadd.f32 %v1822, 1.0
    %v1824 = vrcp.pop %v1823
    %v1825 = vmul.f32 1.0, %v1824
    %v1826 = vtanh.pop %v1819
    %v1828 = vrot.slane %v1733, 6
    %v1830 = vmul.f32 %v1825, %v1828
    %1832 = vrot.lane.b32.xlu0 %v1826, 32
    %v1833 = vpop.permute.xlu0 %1832
    %v1835 = vmul.f32 %v1825, %v1833
    %1837 = vrot.lane.b32.xlu0 %v1835, 32
    %v1838 = vpop.permute.xlu0 %1837
    %v1840 = vadd.f32 %v1830, %v1838
    %v1841 = vtanh.pop %v1840
    %1843 = vrot.lane.b32.xlu0 %v1841, 32
    %v1844 = vpop.permute.xlu0 %1843
    %v1846 = vmul.f32 %v1825, %v1844
    %v1848 = vrot.slane %v1846, 4
    %1849 = vrot.lane.b32.xlu0 %v1848, 64
    %v1850 = vpop.permute.xlu0 %1849
    %v1851 = vsel %vm141, %v1850, 0
    %1853 = vmatprep.subr.mxu0 0.0
    %1854 = vmatpush1.msra.mxu0 0.0
    %1855 = vmatprep.subr.mxu0 0.0
    %1856 = vmatpush1.msra.mxu0 0.0
    %1857 = vmatprep.subr.mxu0 0.0
    %1858 = vmatpush1.msra.mxu0 0.0
    %1859 = vmatprep.subr.mxu0 0.0
    %1860 = vmatpush1.msra.mxu0 0.0
    %1861 = vmatprep.subr.mxu0 0.0
    %1862 = vmatpush1.msra.mxu0 0.0
    %1863 = vmatprep.subr.mxu0 0.0
    %1864 = vmatpush1.msra.mxu0 0.0
    %1865 = vmatprep.subr.mxu0 0.0
    %1866 = vmatpush1.msra.mxu0 0.0
    %1867 = vmatprep.subr.mxu0 0.0
    %1868 = vmatpush1.msra.mxu0 0.0
    %1869 = vmatprep.subr.mxu0 0.0
    %1870 = vmatpush1.msra.mxu0 0.0
    %1871 = vmatprep.subr.mxu0 0.0
    %1872 = vmatpush1.msra.mxu0 0.0
    %1873 = vmatprep.subr.mxu0 0.0
    %1874 = vmatpush1.msra.mxu0 0.0
    %1875 = vmatprep.subr.mxu0 0.0
    %1876 = vmatpush1.msra.mxu0 0.0
    %1877 = vmatprep.subr.mxu0 0.0
    %1878 = vmatpush1.msra.mxu0 %v1026
    %1879 = vmatprep.subr.mxu0 0.0
    %1880 = vmatpush1.msra.mxu0 %v1025
    %1881 = vmatprep.subr.mxu0 0.0
    %1882 = vmatpush1.msra.mxu0 %v1024
    %1883 = vmatprep.subr.mxu0 0.0
    %1884 = vmatpush1.msra.mxu0 %v1023
    %1885 = vmatprep.subr.mxu0 0.0
    %1886 = vmatpush2.msra.mxu0 0.0
    %1887 = vmatprep.subr.mxu0 0.0
    %1888 = vmatpush2.msra.mxu0 0.0
    %1889 = vmatprep.subr.mxu0 0.0
    %1890 = vmatpush2.msra.mxu0 0.0
    %1891 = vmatprep.subr.mxu0 0.0
    %1892 = vmatpush2.msra.mxu0 0.0
    %1893 = vmatprep.subr.mxu0 0.0
    %1894 = vmatpush2.msra.mxu0 0.0
    %1895 = vmatprep.subr.mxu0 0.0
    %1896 = vmatpush2.msra.mxu0 0.0
    %1897 = vmatprep.subr.mxu0 0.0
    %1898 = vmatpush2.msra.mxu0 0.0
    %1899 = vmatprep.subr.mxu0 0.0
    %1900 = vmatpush2.msra.mxu0 0.0
    %1901 = vmatprep.subr.mxu0 0.0
    %1902 = vmatpush2.msra.mxu0 0.0
    %1903 = vmatprep.subr.mxu0 0.0
    %1904 = vmatpush2.msra.mxu0 0.0
    %1905 = vmatprep.subr.mxu0 0.0
    %1906 = vmatpush2.msra.mxu0 0.0
    %1907 = vmatprep.subr.mxu0 0.0
    %1908 = vmatpush2.msra.mxu0 0.0
    %1909 = vmatprep.subr.mxu0 0.0
    %1910 = vmatpush2.msra.mxu0 0.0
    %1911 = vmatprep.subr.mxu0 0.0
    %1912 = vmatpush2.msra.mxu0 0.0
    %1913 = vmatprep.subr.mxu0 0.0
    %1914 = vmatpush2.msra.mxu0 0.0
    %1915 = vmatprep.subr.mxu0 0.0
    %1916 = vmatpush2.msra.mxu0 0.0
    %1917 = vmatprep.mubr.f32.mxu0 0.0
    %1918 = vmatmul.mubr.f32.gmra.mxu0 %v1851
    %v1919 = vpop.f32.mrf.mxu0
    %v1920 = vadd.f32 0.0, %v1919
    %v1921 = vpop.f32.mrf.mxu0
    %1922 = vdwg.mxu0
    %v1924 = vrot.slane %v1920, 2
    %v1926 = vadd.f32 %v1112, %v1924
    %v1927 = vxor.u32 %v1926, 2147483648
    %v1928 = vmul.f32 %v1927, 1.442695
    %v1929 = vpow.pop %v1928
    %v1930 = vadd.f32 %v1929, 1.0
    %v1931 = vrcp.pop %v1930
    %v1932 = vmul.f32 1.0, %v1931
    %v1933 = vtanh.pop %v1926
    %v1935 = vrot.slane %v1840, 6
    %v1937 = vmul.f32 %v1932, %v1935
    %1939 = vrot.lane.b32.xlu0 %v1933, 32
    %v1940 = vpop.permute.xlu0 %1939
    %v1942 = vmul.f32 %v1932, %v1940
    %1944 = vrot.lane.b32.xlu0 %v1942, 32
    %v1945 = vpop.permute.xlu0 %1944
    %v1947 = vadd.f32 %v1937, %v1945
    %v1948 = vtanh.pop %v1947
    %1950 = vrot.lane.b32.xlu0 %v1948, 32
    %v1951 = vpop.permute.xlu0 %1950
    %v1953 = vmul.f32 %v1932, %v1951
    %v1954 = vld [vmem:[%s7] sm:$0x1]
    %v1955 = vld [vmem:[#allocation4] sm:$0x1]
    %v1957 = vlaneseq
    %v1958 = vshrl.u32 %v1957, 7
    %v1959 = vsub.s32 0, %v1958
    %v1960 = vrot.slane %v1954, %v1959
    %1961 = vrot.lane.b32.xlu0 %v1960, 64
    %v1962 = vpop.permute.xlu0 %1961
    %v1964 = vmul.f32 %v1209, %v1962
    %1966 = vrot.lane.b32.xlu0 %v1964, 64
    %v1967 = vpop.permute.xlu0 %1966
    %v1969 = vsel %vm244, %v1967, 0.0
    %1970 = vadd.xlane.f32.xlu0 %v1969
    %v1971 = vpop.xlane.xlu0 %1970
    %v1973 = vlaneseq
    %v1974 = vshrl.u32 %v1973, 7
    %v1975 = vsub.s32 0, %v1974
    %v1976 = vrot.slane %v1955, %v1975
    %v1978 = vadd.f32 %v1971, %v1976
    %v1979 = vmul.f32 %v1315, %v1962
    %1981 = vrot.lane.b32.xlu0 %v1979, 64
    %v1982 = vpop.permute.xlu0 %1981
    %v1984 = vsel %vm353, %v1982, 0.0
    %1985 = vadd.xlane.f32.xlu0 %v1984
    %v1986 = vpop.xlane.xlu0 %1985
    %v1987 = vadd.f32 %v1986, %v1976
    %v1988 = vmul.f32 %v1422, %v1962
    %1990 = vrot.lane.b32.xlu0 %v1988, 64
    %v1991 = vpop.permute.xlu0 %1990
    %v1993 = vsel %vm465, %v1991, 0.0
    %1994 = vadd.xlane.f32.xlu0 %v1993
    %v1995 = vpop.xlane.xlu0 %1994
    %v1996 = vadd.f32 %v1995, %v1976
    %v1997 = vmul.f32 %v1529, %v1962
    %1999 = vrot.lane.b32.xlu0 %v1997, 64
    %v2000 = vpop.permute.xlu0 %1999
    %v2002 = vsel %vm577, %v2000, 0.0
    %2003 = vadd.xlane.f32.xlu0 %v2002
    %v2004 = vpop.xlane.xlu0 %2003
    %v2005 = vadd.f32 %v2004, %v1976
    %v2006 = vmul.f32 %v1633, %v1962
    %2008 = vrot.lane.b32.xlu0 %v2006, 64
    %v2009 = vpop.permute.xlu0 %2008
    %v2011 = vsel %vm244, %v2009, 0.0
    %2012 = vadd.xlane.f32.xlu0 %v2011
    %v2013 = vpop.xlane.xlu0 %2012
    %v2014 = vadd.f32 %v2013, %v1976
    %v2015 = vmul.f32 %v1739, %v1962
    %2017 = vrot.lane.b32.xlu0 %v2015, 64
    %v2018 = vpop.permute.xlu0 %2017
    %v2020 = vsel %vm353, %v2018, 0.0
    %2021 = vadd.xlane.f32.xlu0 %v2020
    %v2022 = vpop.xlane.xlu0 %2021
    %v2023 = vadd.f32 %v2022, %v1976
    %v2024 = vmul.f32 %v1846, %v1962
    %2026 = vrot.lane.b32.xlu0 %v2024, 64
    %v2027 = vpop.permute.xlu0 %2026
    %v2029 = vsel %vm465, %v2027, 0.0
    %2030 = vadd.xlane.f32.xlu0 %v2029
    %v2031 = vpop.xlane.xlu0 %2030
    %v2032 = vadd.f32 %v2031, %v1976
    %v2033 = vmul.f32 %v1953, %v1962
    %2035 = vrot.lane.b32.xlu0 %v2033, 64
    %v2036 = vpop.permute.xlu0 %2035
    %v2038 = vsel %vm577, %v2036, 0.0
    %2039 = vadd.xlane.f32.xlu0 %v2038
    %v2040 = vpop.xlane.xlu0 %2039
    %v2041 = vadd.f32 %v2040, %v1976
    %v2043 = vrot.slane %v1987, 2
    %v2045 = vmax.f32 %v1978, %v2043
    %v2047 = vrot.slane %v1996, 4
    %v2049 = vmax.f32 %v2045, %v2047
    %v2051 = vrot.slane %v2005, 6
    %v2053 = vmax.f32 %v2049, %v2051
    %v2054 = vmax.f32 %v2053, %v2014
    %v2056 = vrot.slane %v2023, 2
    %v2058 = vmax.f32 %v2054, %v2056
    %v2060 = vrot.slane %v2032, 4
    %v2062 = vmax.f32 %v2058, %v2060
    %v2064 = vrot.slane %v2041, 6
    %v2066 = vmax.f32 %v2062, %v2064
    %v2067 = vsub.f32 %v1978, %v2066
    %v2068 = vmul.f32 %v2067, 1.442695
    %v2069 = vpow.pop %v2068
    %v2071 = vrot.slane %v2066, 6
    %v2073 = vsub.f32 %v1987, %v2071
    %v2074 = vmul.f32 %v2073, 1.442695
    %v2075 = vpow.pop %v2074
    %v2076 = vrot.slane %v2066, 4
    %v2078 = vsub.f32 %v1996, %v2076
    %v2079 = vmul.f32 %v2078, 1.442695
    %v2080 = vpow.pop %v2079
    %v2081 = vrot.slane %v2066, 2
    %v2083 = vsub.f32 %v2005, %v2081
    %v2084 = vmul.f32 %v2083, 1.442695
    %v2085 = vpow.pop %v2084
    %v2086 = vsub.f32 %v2014, %v2066
    %v2087 = vmul.f32 %v2086, 1.442695
    %v2088 = vpow.pop %v2087
    %v2089 = vsub.f32 %v2023, %v2071
    %v2090 = vmul.f32 %v2089, 1.442695
    %v2091 = vpow.pop %v2090
    %v2092 = vsub.f32 %v2032, %v2076
    %v2093 = vmul.f32 %v2092, 1.442695
    %v2094 = vpow.pop %v2093
    %v2095 = vsub.f32 %v2041, %v2081
    %v2096 = vmul.f32 %v2095, 1.442695
    %v2097 = vpow.pop %v2096
    %v2099 = vrot.slane %v2075, 2
    %v2101 = vadd.f32 %v2069, %v2099
    %v2103 = vrot.slane %v2080, 4
    %v2105 = vadd.f32 %v2101, %v2103
    %v2107 = vrot.slane %v2085, 6
    %v2109 = vadd.f32 %v2105, %v2107
    %v2110 = vadd.f32 %v2109, %v2088
    %v2112 = vrot.slane %v2091, 2
    %v2114 = vadd.f32 %v2110, %v2112
    %v2116 = vrot.slane %v2094, 4
    %v2118 = vadd.f32 %v2114, %v2116
    %v2120 = vrot.slane %v2097, 6
    %v2122 = vadd.f32 %v2118, %v2120
    %v2123 = vrcp.pop %v2122
    %v2124 = vmul.f32 %v2069, %v2123
    %2126 = vset.pattern.permute.xlu0 0
    %2127 = vperm.xlu0 %2126, %v2124
    %v2128 = vpop.permute.xlu0 %2127
    %v2130 = vmul.f32 %v2128, %v1209
    %v2133 = vunpack.c.l.s4 1983009808
    %v2134 = vunpack.c.0.s8 %v2133
    %v2135 = vlaneseq
    %v2136 = vshrl.u32 %v2135, 7
    %v2137 = vsub.s32 %v2134, %v2136
    %v2138 = vrot.slane %v2130, %v2137
    %2139 = vrot.lane.b32.xlu0 %v2138, 64
    %v2140 = vpop.permute.xlu0 %2139
    %2142 = vst.msk [vmem:[#allocation3] sm:$0x3] %vm244, %v2140
    %v2144 = vrot.slane %v2122, 6
    %v2146 = vrcp.pop %v2144
    %v2147 = vmul.f32 %v2075, %v2146
    %2149 = vset.pattern.permute.xlu0 0
    %2150 = vperm.xlu0 %2149, %v2147
    %v2151 = vpop.permute.xlu0 %2150
    %v2153 = vmul.f32 %v2151, %v1315
    %v2156 = vunpack.c.l.s4 1983009808
    %v2157 = vunpack.c.0.s8 %v2156
    %v2158 = vlaneseq
    %v2159 = vshrl.u32 %v2158, 7
    %v2160 = vsub.s32 %v2157, %v2159
    %v2161 = vrot.slane %v2153, %v2160
    %v2162 = vcombine.high %v2161, %v2161
    %2163 = vrot.lane.b32.xlu0 %v2162, 96
    %v2164 = vpop.permute.xlu0 %2163
    %vm2166 = vcmask 517376
    %2167 = vst.msk [vmem:[#allocation3] sm:$0x3] %vm2166, %v2164
    %v2168 = vrot.slane %v2122, 4
    %v2170 = vrcp.pop %v2168
    %v2171 = vmul.f32 %v2080, %v2170
    %2173 = vset.pattern.permute.xlu0 0
    %2174 = vperm.xlu0 %2173, %v2171
    %v2175 = vpop.permute.xlu0 %2174
    %v2177 = vmul.f32 %v2175, %v1422
    %v2179 = vcombine.high %v2177, %v2177
    %v2181 = vunpack.c.l.s4 1983009808
    %v2182 = vunpack.c.0.s8 %v2181
    %v2183 = vlaneseq
    %v2184 = vshrl.u32 %v2183, 7
    %v2185 = vsub.s32 %v2182, %v2184
    %v2186 = vrot.slane %v2179, %v2185
    %vm2188 = vcmask 779776
    %2189 = vst.msk [vmem:[#allocation3] sm:$0x3] %vm2188, %v2186
    %v2190 = vrot.slane %v2122, 2
    %v2192 = vrcp.pop %v2190
    %v2193 = vmul.f32 %v2085, %v2192
    %2195 = vset.pattern.permute.xlu0 0
    %2196 = vperm.xlu0 %2195, %v2193
    %v2197 = vpop.permute.xlu0 %2196
    %v2199 = vmul.f32 %v2197, %v1529
    %v2201 = vcombine.high %v2199, %v2199
    %v2203 = vunpack.c.l.s4 1983009808
    %v2204 = vunpack.c.0.s8 %v2203
    %v2205 = vlaneseq
    %v2206 = vshrl.u32 %v2205, 7
    %v2207 = vsub.s32 %v2204, %v2206
    %v2208 = vrot.slane %v2201, %v2207
    %v2209 = vcombine.high %v2208, %v2208
    %2210 = vrot.lane.b32.xlu0 %v2209, 32
    %v2211 = vpop.permute.xlu0 %2210
    %vm2213 = vcmask 1042176
    %2214 = vst.msk [vmem:[#allocation3] sm:$0x3] %vm2213, %v2211
    %v2215 = vmul.f32 %v2088, %v2123
    %2217 = vset.pattern.permute.xlu0 0
    %2218 = vperm.xlu0 %2217, %v2215
    %v2219 = vpop.permute.xlu0 %2218
    %v2221 = vmul.f32 %v2219, %v1633
    %v2224 = vunpack.c.l.s4 1983009808
    %v2225 = vunpack.c.0.s8 %v2224
    %v2226 = vlaneseq
    %v2227 = vshrl.u32 %v2226, 7
    %v2228 = vsub.s32 %v2225, %v2227
    %v2229 = vrot.slane %v2221, %v2228
    %2230 = vrot.lane.b32.xlu0 %v2229, 64
    %v2231 = vpop.permute.xlu0 %2230
    %2233 = vst.msk [vmem:[#allocation3 + $0x2] sm:$0x3] %vm244, %v2231
    %v2234 = vmul.f32 %v2091, %v2146
    %2236 = vset.pattern.permute.xlu0 0
    %2237 = vperm.xlu0 %2236, %v2234
    %v2238 = vpop.permute.xlu0 %2237
    %v2240 = vmul.f32 %v2238, %v1739
    %v2243 = vunpack.c.l.s4 1983009808
    %v2244 = vunpack.c.0.s8 %v2243
    %v2245 = vlaneseq
    %v2246 = vshrl.u32 %v2245, 7
    %v2247 = vsub.s32 %v2244, %v2246
    %v2248 = vrot.slane %v2240, %v2247
    %v2249 = vcombine.high %v2248, %v2248
    %2250 = vrot.lane.b32.xlu0 %v2249, 96
    %v2251 = vpop.permute.xlu0 %2250
    %2253 = vst.msk [vmem:[#allocation3 + $0x2] sm:$0x3] %vm2166, %v2251
    %v2254 = vmul.f32 %v2094, %v2170
    %2256 = vset.pattern.permute.xlu0 0
    %2257 = vperm.xlu0 %2256, %v2254
    %v2258 = vpop.permute.xlu0 %2257
    %v2260 = vmul.f32 %v2258, %v1846
    %v2262 = vcombine.high %v2260, %v2260
    %v2264 = vunpack.c.l.s4 1983009808
    %v2265 = vunpack.c.0.s8 %v2264
    %v2266 = vlaneseq
    %v2267 = vshrl.u32 %v2266, 7
    %v2268 = vsub.s32 %v2265, %v2267
    %v2269 = vrot.slane %v2262, %v2268
    %2271 = vst.msk [vmem:[#allocation3 + $0x2] sm:$0x3] %vm2188, %v2269
    %v2272 = vmul.f32 %v2097, %v2192
    %2274 = vset.pattern.permute.xlu0 0
    %2275 = vperm.xlu0 %2274, %v2272
    %v2276 = vpop.permute.xlu0 %2275
    %v2278 = vmul.f32 %v2276, %v1953
    %v2280 = vcombine.high %v2278, %v2278
    %v2282 = vunpack.c.l.s4 1983009808
    %v2283 = vunpack.c.0.s8 %v2282
    %v2284 = vlaneseq
    %v2285 = vshrl.u32 %v2284, 7
    %v2286 = vsub.s32 %v2283, %v2285
    %v2287 = vrot.slane %v2280, %v2286
    %v2288 = vcombine.high %v2287, %v2287
    %2289 = vrot.lane.b32.xlu0 %v2288, 32
    %v2290 = vpop.permute.xlu0 %2289
    %2292 = vst.msk [vmem:[#allocation3 + $0x2] sm:$0x3] %vm2213, %v2290
    %v2293 = vld [vmem:[#allocation3] sm:$0xf]
    %v2294 = vld [vmem:[%s9] sm:$0xff]
    %v2295 = vld [vmem:[%s9 + $0x8] sm:$0xff]
    %v2296 = vld [vmem:[%s9 + $0x10] sm:$0xff]
    %v2297 = vld [vmem:[%s9 + $0x18] sm:$0xff]
    %v2298 = vld [vmem:[%s9 + $0x20] sm:$0xff]
    %v2299 = vld [vmem:[%s9 + $0x28] sm:$0xff]
    %v2300 = vld [vmem:[%s9 + $0x30] sm:$0xff]
    %v2301 = vld [vmem:[%s9 + $0x38] sm:$0xff]
    %v2302 = vld [vmem:[%s9 + $0x40] sm:$0xff]
    %v2303 = vld [vmem:[%s9 + $0x48] sm:$0xff]
    %v2304 = vld [vmem:[%s9 + $0x50] sm:$0xff]
    %v2305 = vld [vmem:[%s9 + $0x58] sm:$0xff]
    %v2306 = vld [vmem:[%s9 + $0x60] sm:$0xff]
    %v2307 = vld [vmem:[%s9 + $0x68] sm:$0xff]
    %v2308 = vld [vmem:[%s9 + $0x70] sm:$0xff]
    %v2309 = vld [vmem:[%s9 + $0x78] sm:$0xff]
    %v2310 = vld [vmem:[%s9 + $0x80] sm:$0xff]
    %v2311 = vld [vmem:[%s9 + $0x88] sm:$0xff]
    %v2312 = vld [vmem:[%s9 + $0x90] sm:$0xff]
    %v2313 = vld [vmem:[%s9 + $0x98] sm:$0xff]
    %v2314 = vld [vmem:[%s9 + $0xa0] sm:$0xff]
    %v2315 = vld [vmem:[%s9 + $0xa8] sm:$0xff]
    %v2316 = vld [vmem:[%s9 + $0xb0] sm:$0xff]
    %v2317 = vld [vmem:[%s9 + $0xb8] sm:$0xff]
    %v2318 = vld [vmem:[%s9 + $0xc0] sm:$0xff]
    %v2319 = vld [vmem:[%s9 + $0xc8] sm:$0xff]
    %v2320 = vld [vmem:[%s9 + $0xd0] sm:$0xff]
    %v2321 = vld [vmem:[%s9 + $0xd8] sm:$0xff]
    %v2322 = vld [vmem:[%s9 + $0xe0] sm:$0xff]
    %v2323 = vld [vmem:[%s9 + $0xe8] sm:$0xff]
    %v2324 = vld [vmem:[%s9 + $0xf0] sm:$0xff]
    %v2325 = vld [vmem:[%s9 + $0xf8] sm:$0xff]
    %v2326 = vld [vmem:[%s10] sm:$0x1]
    %v2328 = vlaneseq
    %v2329 = vshrl.u32 %v2328, 7
    %v2330 = vsub.s32 0, %v2329
    %v2331 = vrot.slane %v2326, %v2330
    %v2335 = vunpack.c.l.s4 1983009808
    %v2336 = vunpack.c.0.s8 %v2335
    %v2337 = vlaneseq
    %v2338 = vshrl.u32 %v2337, 7
    %v2339 = vsub.s32 %v2336, %v2338
    %v2340 = vrot.slane %v2293, %v2339
    %v2341 = vcombine.high %v2340, %v2340
    %2344 = vmatprep.subr.mxu0 0.0
    %2345 = vmatpush1.msra.mxu0 %v2309
    %2346 = vmatprep.subr.mxu0 0.0
    %2347 = vmatpush1.msra.mxu0 %v2308
    %2348 = vmatprep.subr.mxu0 0.0
    %2349 = vmatpush1.msra.mxu0 %v2307
    %2350 = vmatprep.subr.mxu0 0.0
    %2351 = vmatpush1.msra.mxu0 %v2306
    %2352 = vmatprep.subr.mxu0 0.0
    %2353 = vmatpush1.msra.mxu0 %v2305
    %2354 = vmatprep.subr.mxu0 0.0
    %2355 = vmatpush1.msra.mxu0 %v2304
    %2356 = vmatprep.subr.mxu0 0.0
    %2357 = vmatpush1.msra.mxu0 %v2303
    %2358 = vmatprep.subr.mxu0 0.0
    %2359 = vmatpush1.msra.mxu0 %v2302
    %2360 = vmatprep.subr.mxu0 0.0
    %2361 = vmatpush1.msra.mxu0 %v2301
    %2362 = vmatprep.subr.mxu0 0.0
    %2363 = vmatpush1.msra.mxu0 %v2300
    %2364 = vmatprep.subr.mxu0 0.0
    %2365 = vmatpush1.msra.mxu0 %v2299
    %2366 = vmatprep.subr.mxu0 0.0
    %2367 = vmatpush1.msra.mxu0 %v2298
    %2368 = vmatprep.subr.mxu0 0.0
    %2369 = vmatpush1.msra.mxu0 %v2297
    %2370 = vmatprep.subr.mxu0 0.0
    %2371 = vmatpush1.msra.mxu0 %v2296
    %2372 = vmatprep.subr.mxu0 0.0
    %2373 = vmatpush1.msra.mxu0 %v2295
    %2374 = vmatprep.subr.mxu0 0.0
    %2375 = vmatpush1.msra.mxu0 %v2294
    %2376 = vmatprep.subr.mxu0 0.0
    %2377 = vmatpush2.msra.mxu0 %v2325
    %2378 = vmatprep.subr.mxu0 0.0
    %2379 = vmatpush2.msra.mxu0 %v2324
    %2380 = vmatprep.subr.mxu0 0.0
    %2381 = vmatpush2.msra.mxu0 %v2323
    %2382 = vmatprep.subr.mxu0 0.0
    %2383 = vmatpush2.msra.mxu0 %v2322
    %2384 = vmatprep.subr.mxu0 0.0
    %2385 = vmatpush2.msra.mxu0 %v2321
    %2386 = vmatprep.subr.mxu0 0.0
    %2387 = vmatpush2.msra.mxu0 %v2320
    %2388 = vmatprep.subr.mxu0 0.0
    %2389 = vmatpush2.msra.mxu0 %v2319
    %2390 = vmatprep.subr.mxu0 0.0
    %2391 = vmatpush2.msra.mxu0 %v2318
    %2392 = vmatprep.subr.mxu0 0.0
    %2393 = vmatpush2.msra.mxu0 %v2317
    %2394 = vmatprep.subr.mxu0 0.0
    %2395 = vmatpush2.msra.mxu0 %v2316
    %2396 = vmatprep.subr.mxu0 0.0
    %2397 = vmatpush2.msra.mxu0 %v2315
    %2398 = vmatprep.subr.mxu0 0.0
    %2399 = vmatpush2.msra.mxu0 %v2314
    %2400 = vmatprep.subr.mxu0 0.0
    %2401 = vmatpush2.msra.mxu0 %v2313
    %2402 = vmatprep.subr.mxu0 0.0
    %2403 = vmatpush2.msra.mxu0 %v2312
    %2404 = vmatprep.subr.mxu0 0.0
    %2405 = vmatpush2.msra.mxu0 %v2311
    %2406 = vmatprep.subr.mxu0 0.0
    %2407 = vmatpush2.msra.mxu0 %v2310
    %2408 = vmatprep.mubr.f32.mxu0 %v2341
    %2409 = vmatmul.mubr.f32.gmra.mxu0 %v2340
    %v2410 = vpop.f32.mrf.mxu0
    %v2411 = vadd.f32 %v2331, %v2410
    %v2412 = vpop.f32.mrf.mxu0
    %2413 = vdwg.mxu0
    %vm2414 = vcmask 58368
    %2415 = vst.msk [vmem:[#allocation5] sm:$0x3] %vm2414, %v2411
    // Predicated region
    $region46: #{tpu_custom_call.1} parent=1 // pred_check
      _
    $region47: #{tpu_custom_call.1} parent=1 // pred_check_branch
      %2417 = sbr.rel (0) target = $region49
    $region48: #{tpu_custom_call.1} parent=1 // pred_region
      %s2419 = ssub.s32 32, 32
      %2420 = vsyncadd [#allocation6], %s2419
      %s2422 = sshll.u32 [#allocation5], 4
      %s2423 = int_to_ptr.vmem [resolvable:$true] %s2422
      %2425 = dma.vmem_to_hbm [thread:$0]  %s2423, 32, %s11, [#allocation6]
    $region49: #{tpu_custom_call.1} parent=1 // pred_fallthru
      _
    // Predicated region
    $region50: #{tpu_custom_call.1} parent=1 // pred_check
      _
    $region51: #{tpu_custom_call.1} parent=1 // pred_check_branch
      %2427 = sbr.rel (0) target = $region53
    $region52: #{tpu_custom_call.1} parent=1 // pred_region
      %2428 = dma.done [#allocation6], 32
    $region53: #{tpu_custom_call.1} parent=1 // pred_fallthru
      _
    %2429 = vsyncpa [#allocation6], 1

</llo_original>
